<compile_context>
chip_gen: v6e
topology: v6e:2x2x1
jax: 0.10.0
libtpu: 0.0.40
codegen_flags: <defaults>
</compile_context>

<pallas_src>
import functools

import jax
import jax.numpy as jnp
from jax.experimental import pallas as pl
from jax.experimental.pallas import tpu as pltpu

EPS = 1e-5  # torch.nn.BatchNorm2d default


# ----------------------------------------------------------------------------- kernels
def _stats_kernel(p_ref, x_ref, w3_ref, w5_ref, w1_ref, stats_ref, *, inv_count):
    """Pass 1: accumulate per-branch, per-channel sum / sum-of-squares."""
    t = pl.program_id(0)

    @pl.when(t == 0)
    def _init():
        stats_ref[...] = jnp.zeros_like(stats_ref)

    p = p_ref[...]                       # (K*K*Cin, T)
    xc = x_ref[...]                      # (Cin, T)
    y3 = jnp.dot(w3_ref[...], p, preferred_element_type=jnp.float32)   # (Cout, T)
    y5 = jnp.dot(w5_ref[...], p, preferred_element_type=jnp.float32)
    y1 = jnp.dot(w1_ref[...], xc, preferred_element_type=jnp.float32)

    ones = jnp.ones((p.shape[1], 1), jnp.float32)

    def col_sums(y):
        # per-channel sum / sum-of-squares via MXU (keeps the XLU free)
        return (jnp.dot(y, ones, preferred_element_type=jnp.float32),
                jnp.dot(y * y, ones, preferred_element_type=jnp.float32))

    s3, q3 = col_sums(y3)
    s5, q5 = col_sums(y5)
    s1, q1 = col_sums(y1)
    stats_ref[...] += jnp.concatenate([s3, s5, s1, q3, q5, q1], axis=1)  # (Cout, 6)

    @pl.when(t == pl.num_programs(0) - 1)
    def _finalize():
        acc = stats_ref[...]
        mean = acc[:, 0:3] * inv_count                 # per-branch mean
        msq = acc[:, 3:6] * inv_count                  # per-branch E[y^2]
        var = jnp.maximum(msq - mean * mean, 0.0)      # biased variance
        stats_ref[...] = jnp.concatenate([mean, jax.lax.rsqrt(var + EPS)], axis=1)


def _apply_kernel(p_ref, x_ref, w3_ref, w5_ref, w1_ref, stats_ref, alpha_ref,
                  o_ref, *, add_residual: bool):
    """Pass 2: normalize the three branches, sum (+residual), PReLU, one store."""
    p = p_ref[...]
    xc = x_ref[...]
    y3 = jnp.dot(w3_ref[...], p, preferred_element_type=jnp.float32)
    y5 = jnp.dot(w5_ref[...], p, preferred_element_type=jnp.float32)
    y1 = jnp.dot(w1_ref[...], xc, preferred_element_type=jnp.float32)

    stats = stats_ref[...]                             # (Cout, 6): means | rsqrt
    y = ((y3 - stats[:, 0:1]) * stats[:, 3:4]
         + (y5 - stats[:, 1:2]) * stats[:, 4:5]
         + (y1 - stats[:, 2:3]) * stats[:, 5:6])
    if add_residual:                                   # static: in_cs==out_cs, stride==1
        y = y + xc.astype(jnp.float32)
    a = alpha_ref[0]                                   # PReLU slope (SMEM scalar)
    o_ref[...] = jnp.where(y >= 0.0, y, a * y)


# ----------------------------------------------------------------------------- wrapper
def _im2col(x_nchw, k, pad):
    """(N,C,H,W) -> (k*k*C, N*H*W) shifted patches (stride 1, zero padding)."""
    N, C, H, W = x_nchw.shape
    xp = jnp.pad(x_nchw, ((0, 0), (0, 0), (pad, pad), (pad, pad)))
    cols = []
    for dy in range(k):
        for dx in range(k):
            win = xp[:, :, dy:dy + H, dx:dx + W]                       # (N,C,H,W)
            cols.append(jnp.transpose(win, (1, 0, 2, 3)).reshape(C, N * H * W))
    return jnp.concatenate(cols, axis=0)               # row = tap*C + c


def lk_layer_forward(x, params, *, kernel_size=5, stride=1, padding=2,
                     tile_p=1024, matmul_dtype=jnp.float32):
    """matmul_dtype=jnp.bfloat16 halves patch traffic on v6e/v7x (f32 accumulate)."""
    assert stride == 1, "strided `large` branch not implemented"
    assert kernel_size == 2 * padding + 1 and padding >= 1

    N, Cin, H, W = x.shape
    Cout = params["w_regular"].shape[0]
    K = kernel_size
    KKC = K * K * Cin
    NHW = N * H * W
    add_residual = (Cin == Cout) and (stride == 1)

    # One shared im2col for the KxK taps; channel-major x for 1x1 conv + residual.
    patches = _im2col(x, K, padding)                                   # (KKC, NHW)
    xcm = jnp.transpose(x, (1, 0, 2, 3)).reshape(Cin, NHW)             # (Cin, NHW)

    # Weights as (Cout, tap*Cin) matrices; 3x3 embedded into the centred KxK taps.
    w5f = jnp.transpose(params["w_large"], (0, 2, 3, 1)).reshape(Cout, KKC)
    w3f = jnp.zeros((Cout, K, K, Cin), x.dtype).at[
        :, padding - 1:padding + 2, padding - 1:padding + 2, :].set(
        jnp.transpose(params["w_regular"], (0, 2, 3, 1))).reshape(Cout, KKC)
    w1m = params["w_one"].reshape(Cout, Cin)
    alpha = params["prelu"].reshape(1).astype(jnp.float32)
    # Conv biases are intentionally dropped (exact no-op before affine=False BN).

    patches = patches.astype(matmul_dtype)
    xcm = xcm.astype(matmul_dtype)
    w5f = w5f.astype(matmul_dtype)
    w3f = w3f.astype(matmul_dtype)
    w1m = w1m.astype(matmul_dtype)

    # Pixel tiling (lane-aligned); zero-pad NHW so the last tile is full.
    tp = min(tile_p, ((NHW + 127) // 128) * 128)
    nhw_pad = pl.cdiv(NHW, tp) * tp
    if nhw_pad != NHW:
        patches = jnp.pad(patches, ((0, 0), (0, nhw_pad - NHW)))
        xcm = jnp.pad(xcm, ((0, 0), (0, nhw_pad - NHW)))
    nt = nhw_pad // tp

    pix_spec_p = pl.BlockSpec((KKC, tp), lambda t: (0, t))
    pix_spec_x = pl.BlockSpec((Cin, tp), lambda t: (0, t))
    w3_spec = pl.BlockSpec((Cout, KKC), lambda t: (0, 0))
    w5_spec = pl.BlockSpec((Cout, KKC), lambda t: (0, 0))
    w1_spec = pl.BlockSpec((Cout, Cin), lambda t: (0, 0))
    stats_spec = pl.BlockSpec((Cout, 6), lambda t: (0, 0))

    # Pass 1: per-branch, per-channel batch statistics (accumulated across tiles).
    stats = pl.pallas_call(
        functools.partial(_stats_kernel, inv_count=1.0 / NHW),
        grid=(nt,),
        in_specs=[pix_spec_p, pix_spec_x, w3_spec, w5_spec, w1_spec],
        out_specs=stats_spec,
        out_shape=jax.ShapeDtypeStruct((Cout, 6), jnp.float32),
        compiler_params=pltpu.CompilerParams(
            dimension_semantics=("arbitrary",)),
    )(patches, xcm, w3f, w5f, w1m)

    # Pass 2: normalize + sum branches (+residual) + PReLU, tile-parallel.
    out = pl.pallas_call(
        functools.partial(_apply_kernel, add_residual=add_residual),
        grid=(nt,),
        in_specs=[pix_spec_p, pix_spec_x, w3_spec, w5_spec, w1_spec, stats_spec,
                  pl.BlockSpec(memory_space=pltpu.MemorySpace.SMEM)],
        out_specs=pl.BlockSpec((Cout, tp), lambda t: (0, t)),
        out_shape=jax.ShapeDtypeStruct((Cout, nhw_pad), jnp.float32),
        compiler_params=pltpu.CompilerParams(
            dimension_semantics=("parallel",)),
    )(patches, xcm, w3f, w5f, w1m, stats, alpha)

    out = out[:, :NHW]
    return jnp.transpose(out.reshape(Cout, N, H, W), (1, 0, 2, 3))  # back to NCHW


# ----------------------------------------------------------------------------- reference
def lk_layer_reference(x, params, *, kernel_size=5, stride=1, padding=2):
    """Pure-JAX reference (NCHW, lax.conv) matching the PyTorch module."""
    def branch(w, b, pad):
        y = jax.lax.conv_general_dilated(
            x, w, window_strides=(stride, stride),
            padding=[(pad, pad), (pad, pad)],
            dimension_numbers=("NCHW", "OIHW", "NCHW"),
            precision=jax.lax.Precision.HIGHEST)
        y = y + b.reshape(1, -1, 1, 1)
        mean = jnp.mean(y, axis=(0, 2, 3), keepdims=True)
        var = jnp.mean((y - mean) ** 2, axis=(0, 2, 3), keepdims=True)
        return (y - mean) * jax.lax.rsqrt(var + EPS)

    y = branch(params["w_regular"], params["b_regular"], 1)
    y = y + branch(params["w_large"], params["b_large"], padding)
    y = y + branch(params["w_one"], params["b_one"], 0)
    if x.shape[1] == params["w_regular"].shape[0] and stride == 1:
        y = y + x
    a = params["prelu"].reshape(1, 1, 1, 1)
    return jnp.where(y >= 0.0, y, a * y)


if __name__ == "__main__":
    key = jax.random.PRNGKey(0)
    N, C, H, W = 2, 4, 16, 16
    in_cs = out_cs = C
    ks = jax.random.split(key, 7)

    x = jax.random.normal(ks[0], (N, in_cs, H, W), jnp.float32)
    # Deterministic synthetic parameters (module __init__ zero-init would make
    # the forward trivial, so use small random weights with the same shapes).
    params = {
        "w_regular": 0.1 * jax.random.normal(ks[1], (out_cs, in_cs, 3, 3), jnp.float32),
        "b_regular": 0.1 * jax.random.normal(ks[2], (out_cs,), jnp.float32),
        "w_large":   0.1 * jax.random.normal(ks[3], (out_cs, in_cs, 5, 5), jnp.float32),
        "b_large":   0.1 * jax.random.normal(ks[4], (out_cs,), jnp.float32),
        "w_one":     0.1 * jax.random.normal(ks[5], (out_cs, in_cs, 1, 1), jnp.float32),
        "b_one":     0.1 * jax.random.normal(ks[6], (out_cs,), jnp.float32),
        "prelu":     jnp.array([0.25], jnp.float32),  # nn.PReLU() default init
    }

    out = jax.block_until_ready(lk_layer_forward(x, params))
    ref = jax.block_until_ready(lk_layer_reference(x, params))

    assert out.shape == (N, out_cs, H, W)
    if not bool(jnp.allclose(out, ref, atol=2e-3, rtol=2e-3)):
        raise AssertionError(
            f"kernel/reference mismatch, max abs err={float(jnp.max(jnp.abs(out - ref)))}")
    print("KERNEL_OK")
</pallas_src>

<mosaic_0001>
module attributes {stable_mosaic.version = 11 : i64} {
  func.func @_stats_kernel(%arg0: i32, %arg1: memref<100x512xf32, #tpu.memory_space<vmem>>, %arg2: memref<4x512xf32, #tpu.memory_space<vmem>>, %arg3: memref<4x100xf32, #tpu.memory_space<vmem>>, %arg4: memref<4x100xf32, #tpu.memory_space<vmem>>, %arg5: memref<4x4xf32, #tpu.memory_space<vmem>>, %arg6: memref<4x6xf32, #tpu.memory_space<vmem>>) attributes {dimension_semantics = [#tpu.dimension_semantics<arbitrary>], iteration_bounds = array<i64: 1>, scalar_prefetch = 0 : i64, scratch_operands = 0 : i64, tpu.core_type = #tpu.core_type<tc>, window_params = [{transform_indices = @transform_0, window_bounds = array<i64: 100, 512>}, {transform_indices = @transform_1, window_bounds = array<i64: 4, 512>}, {pipeline_mode = #tpu.pipeline_mode<synchronous>, transform_indices = @transform_2, window_bounds = array<i64: 4, 100>}, {pipeline_mode = #tpu.pipeline_mode<synchronous>, transform_indices = @transform_3, window_bounds = array<i64: 4, 100>}, {pipeline_mode = #tpu.pipeline_mode<synchronous>, transform_indices = @transform_4, window_bounds = array<i64: 4, 4>}, {pipeline_mode = #tpu.pipeline_mode<synchronous>, transform_indices = @transform_5, window_bounds = array<i64: 4, 6>}]} {
    %c0_i32 = arith.constant 0 : i32
    %0 = arith.cmpi eq, %arg0, %c0_i32 : i32
    %1 = arith.extui %0 : i1 to i32
    %c0_i32_0 = arith.constant 0 : i32
    %2 = arith.cmpi ne, %1, %c0_i32_0 : i32
    scf.if %2 {
      %cst_25 = arith.constant 0.000000e+00 : f32
      %28 = vector.broadcast %cst_25 : f32 to vector<4x6xf32>
      %c0_26 = arith.constant 0 : index
      %c0_27 = arith.constant 0 : index
      %29 = vector.load %arg6[%c0_26, %c0_27] : memref<4x6xf32, #tpu.memory_space<vmem>>, vector<4x6xf32>
      tpu.vector_store %arg6[%c0_26, %c0_27], %28 {strides = array<i32>} : memref<4x6xf32, #tpu.memory_space<vmem>>, vector<4x6xf32>,
    } else {
    }
    %c0 = arith.constant 0 : index
    %c0_1 = arith.constant 0 : index
    %3 = vector.load %arg1[%c0, %c0_1] : memref<100x512xf32, #tpu.memory_space<vmem>>, vector<100x512xf32>
    %c0_2 = arith.constant 0 : index
    %c0_3 = arith.constant 0 : index
    %4 = vector.load %arg2[%c0_2, %c0_3] : memref<4x512xf32, #tpu.memory_space<vmem>>, vector<4x512xf32>
    %c0_4 = arith.constant 0 : index
    %c0_5 = arith.constant 0 : index
    %5 = vector.load %arg3[%c0_4, %c0_5] : memref<4x100xf32, #tpu.memory_space<vmem>>, vector<4x100xf32>
    %cst = arith.constant dense<0.000000e+00> : vector<4x512xf32>
    %6 = tpu.matmul %5, %3, %cst {dimension_numbers = #tpu.dot_dimension_numbers<[1], [0], [0], [1], [0, 0, 1, 1], [], []>} : vector<4x100xf32>, vector<100x512xf32>, vector<4x512xf32> -> vector<4x512xf32>
    %c0_6 = arith.constant 0 : index
    %c0_7 = arith.constant 0 : index
    %7 = vector.load %arg4[%c0_6, %c0_7] : memref<4x100xf32, #tpu.memory_space<vmem>>, vector<4x100xf32>
    %cst_8 = arith.constant dense<0.000000e+00> : vector<4x512xf32>
    %8 = tpu.matmul %7, %3, %cst_8 {dimension_numbers = #tpu.dot_dimension_numbers<[1], [0], [0], [1], [0, 0, 1, 1], [], []>} : vector<4x100xf32>, vector<100x512xf32>, vector<4x512xf32> -> vector<4x512xf32>
    %c0_9 = arith.constant 0 : index
    %c0_10 = arith.constant 0 : index
    %9 = vector.load %arg5[%c0_9, %c0_10] : memref<4x4xf32, #tpu.memory_space<vmem>>, vector<4x4xf32>
    %cst_11 = arith.constant dense<0.000000e+00> : vector<4x512xf32>
    %10 = tpu.matmul %9, %4, %cst_11 {dimension_numbers = #tpu.dot_dimension_numbers<[1], [0], [0], [1], [0, 0, 1, 1], [], []>} : vector<4x4xf32>, vector<4x512xf32>, vector<4x512xf32> -> vector<4x512xf32>
    %cst_12 = arith.constant 1.000000e+00 : f32
    %11 = vector.broadcast %cst_12 : f32 to vector<512x1xf32>
    %cst_13 = arith.constant dense<0.000000e+00> : vector<4x1xf32>
    %12 = tpu.matmul %6, %11, %cst_13 {dimension_numbers = #tpu.dot_dimension_numbers<[1], [0], [0], [1], [0, 0, 1, 1], [], []>} : vector<4x512xf32>, vector<512x1xf32>, vector<4x1xf32> -> vector<4x1xf32>
    %13 = arith.mulf %6, %6 : vector<4x512xf32>
    %cst_14 = arith.constant dense<0.000000e+00> : vector<4x1xf32>
    %14 = tpu.matmul %13, %11, %cst_14 {dimension_numbers = #tpu.dot_dimension_numbers<[1], [0], [0], [1], [0, 0, 1, 1], [], []>} : vector<4x512xf32>, vector<512x1xf32>, vector<4x1xf32> -> vector<4x1xf32>
    %cst_15 = arith.constant dense<0.000000e+00> : vector<4x1xf32>
    %15 = tpu.matmul %8, %11, %cst_15 {dimension_numbers = #tpu.dot_dimension_numbers<[1], [0], [0], [1], [0, 0, 1, 1], [], []>} : vector<4x512xf32>, vector<512x1xf32>, vector<4x1xf32> -> vector<4x1xf32>
    %16 = arith.mulf %8, %8 : vector<4x512xf32>
    %cst_16 = arith.constant dense<0.000000e+00> : vector<4x1xf32>
    %17 = tpu.matmul %16, %11, %cst_16 {dimension_numbers = #tpu.dot_dimension_numbers<[1], [0], [0], [1], [0, 0, 1, 1], [], []>} : vector<4x512xf32>, vector<512x1xf32>, vector<4x1xf32> -> vector<4x1xf32>
    %cst_17 = arith.constant dense<0.000000e+00> : vector<4x1xf32>
    %18 = tpu.matmul %10, %11, %cst_17 {dimension_numbers = #tpu.dot_dimension_numbers<[1], [0], [0], [1], [0, 0, 1, 1], [], []>} : vector<4x512xf32>, vector<512x1xf32>, vector<4x1xf32> -> vector<4x1xf32>
    %19 = arith.mulf %10, %10 : vector<4x512xf32>
    %cst_18 = arith.constant dense<0.000000e+00> : vector<4x1xf32>
    %20 = tpu.matmul %19, %11, %cst_18 {dimension_numbers = #tpu.dot_dimension_numbers<[1], [0], [0], [1], [0, 0, 1, 1], [], []>} : vector<4x512xf32>, vector<512x1xf32>, vector<4x1xf32> -> vector<4x1xf32>
    %c0_19 = arith.constant 0 : index
    %c0_20 = arith.constant 0 : index
    %21 = vector.load %arg6[%c0_19, %c0_20] : memref<4x6xf32, #tpu.memory_space<vmem>>, vector<4x6xf32>
    %22 = tpu.concatenate %12, %15, %18, %14, %17, %20 in 1 : vector<4x1xf32>, vector<4x1xf32>, vector<4x1xf32>, vector<4x1xf32>, vector<4x1xf32>, vector<4x1xf32> -> vector<4x6xf32>
    %23 = arith.addf %21, %22 : vector<4x6xf32>
    %c0_21 = arith.constant 0 : index
    %c0_22 = arith.constant 0 : index
    %24 = vector.load %arg6[%c0_21, %c0_22] : memref<4x6xf32, #tpu.memory_space<vmem>>, vector<4x6xf32>
    tpu.vector_store %arg6[%c0_21, %c0_22], %23 {strides = array<i32>} : memref<4x6xf32, #tpu.memory_space<vmem>>, vector<4x6xf32>,
    %c0_i32_23 = arith.constant 0 : i32
    %25 = arith.cmpi eq, %arg0, %c0_i32_23 : i32
    %26 = arith.extui %25 : i1 to i32
    %c0_i32_24 = arith.constant 0 : i32
    %27 = arith.cmpi ne, %26, %c0_i32_24 : i32
    scf.if %27 {
      %c0_25 = arith.constant 0 : index
      %c0_26 = arith.constant 0 : index
      %28 = vector.load %arg6[%c0_25, %c0_26] : memref<4x6xf32, #tpu.memory_space<vmem>>, vector<4x6xf32>
      %29 = vector.extract_strided_slice %28 {offsets = [0, 0], sizes = [4, 3], strides = [1, 1]} : vector<4x6xf32> to vector<4x3xf32>
      %cst_27 = arith.constant 0.001953125 : f32
      %30 = vector.broadcast %cst_27 : f32 to vector<4x3xf32>
      %31 = arith.mulf %29, %30 : vector<4x3xf32>
      %32 = vector.extract_strided_slice %28 {offsets = [0, 3], sizes = [4, 3], strides = [1, 1]} : vector<4x6xf32> to vector<4x3xf32>
      %cst_28 = arith.constant 0.001953125 : f32
      %33 = vector.broadcast %cst_28 : f32 to vector<4x3xf32>
      %34 = arith.mulf %32, %33 : vector<4x3xf32>
      %35 = arith.mulf %31, %31 : vector<4x3xf32>
      %36 = arith.subf %34, %35 : vector<4x3xf32>
      %cst_29 = arith.constant 0.000000e+00 : f32
      %37 = vector.broadcast %cst_29 : f32 to vector<4x3xf32>
      %38 = arith.maximumf %36, %37 : vector<4x3xf32>
      %cst_30 = arith.constant 9.99999974E-6 : f32
      %39 = vector.broadcast %cst_30 : f32 to vector<4x3xf32>
      %40 = arith.addf %38, %39 : vector<4x3xf32>
      %41 = math.rsqrt %40 : vector<4x3xf32>
      %42 = tpu.concatenate %31, %41 in 1 : vector<4x3xf32>, vector<4x3xf32> -> vector<4x6xf32>
      %c0_31 = arith.constant 0 : index
      %c0_32 = arith.constant 0 : index
      %43 = vector.load %arg6[%c0_31, %c0_32] : memref<4x6xf32, #tpu.memory_space<vmem>>, vector<4x6xf32>
      tpu.vector_store %arg6[%c0_31, %c0_32], %42 {strides = array<i32>} : memref<4x6xf32, #tpu.memory_space<vmem>>, vector<4x6xf32>,
    } else {
    }
    return
  }
  func.func @transform_0(%arg0: i32) -> (i32, i32) {
    %c0_i32 = arith.constant 0 : i32
    %c0_i32_0 = arith.constant 0 : i32
    return %c0_i32, %arg0 : i32, i32
  }
  func.func @transform_1(%arg0: i32) -> (i32, i32) {
    %c0_i32 = arith.constant 0 : i32
    %c0_i32_0 = arith.constant 0 : i32
    return %c0_i32, %arg0 : i32, i32
  }
  func.func @transform_2(%arg0: i32) -> (i32, i32) {
    %c0_i32 = arith.constant 0 : i32
    %c0_i32_0 = arith.constant 0 : i32
    %c0_i32_1 = arith.constant 0 : i32
    return %c0_i32, %c0_i32_0 : i32, i32
  }
  func.func @transform_3(%arg0: i32) -> (i32, i32) {
    %c0_i32 = arith.constant 0 : i32
    %c0_i32_0 = arith.constant 0 : i32
    %c0_i32_1 = arith.constant 0 : i32
    return %c0_i32, %c0_i32_0 : i32, i32
  }
  func.func @transform_4(%arg0: i32) -> (i32, i32) {
    %c0_i32 = arith.constant 0 : i32
    %c0_i32_0 = arith.constant 0 : i32
    %c0_i32_1 = arith.constant 0 : i32
    return %c0_i32, %c0_i32_0 : i32, i32
  }
  func.func @transform_5(%arg0: i32) -> (i32, i32) {
    %c0_i32 = arith.constant 0 : i32
    %c0_i32_0 = arith.constant 0 : i32
    %c0_i32_1 = arith.constant 0 : i32
    return %c0_i32, %c0_i32_0 : i32, i32
  }
}

</mosaic_0001>

<llo_original>
// kernel: tpu_custom_call.1
$region0: #{tpu_custom_call.1}
  #allocation0 [shape = 'u32[]', space=smem, size = 0x4, offset = 0x4, fixed_abs, tag = 'smem constant byte address 0x4 - core index']
  #allocation1 [shape = 'u32[144,128]{1,0:T(1,128)}', space=vmem, size = 0x12000, scoped, tag = 'internal scratch']
  %s0 = inlined_call_operand.hbm [shape: f32[100,512], index: 0, kind: input, shape index: {}]
  %s1 = inlined_call_operand.hbm [shape: f32[4,512], index: 1, kind: input, shape index: {}]
  %s2 = inlined_call_operand.hbm [shape: f32[4,100], index: 2, kind: input, shape index: {}]
  %s3 = inlined_call_operand.vmem [shape: f32[4,100], index: 3, kind: input, shape index: {}]
  %s4 = inlined_call_operand.hbm [shape: f32[4,4], index: 4, kind: input, shape index: {}]
  %s5 = inlined_call_operand.hbm [shape: f32[4,6], index: 5, kind: output, shape index: {}]
  %s6 = sld [smem:[#allocation0]]
  $region54: #{tpu_custom_call.1} parent=0
    _
  %s8 = ssub.s32 1, %s6
  %s9 = scalar_select 0, %s8, %s6
  $region1: #{tpu_custom_call.1} parent=0
    #allocation2 [shape = 'u8[212992]{0}', space=vmem, size = 0x34000, scoped, tag = 'input window, operand 0, single buffered']
    #allocation3 [shape = 's32[1]{0}', space=sflag, size = 0x4, scoped, tag = 'scoped memory for tpu_custom_call.1']
    #allocation4 [shape = 's32[1]{0}', space=sflag, size = 0x4, scoped, tag = 'scoped memory for tpu_custom_call.1']
    #allocation5 [shape = 'u8[8192]{0}', space=vmem, size = 0x2000, scoped, tag = 'input window, operand 1, single buffered']
    #allocation6 [shape = 's32[1]{0}', space=sflag, size = 0x4, scoped, tag = 'scoped memory for tpu_custom_call.1']
    #allocation7 [shape = 'u8[2048]{0}', space=vmem, size = 0x800, scoped, tag = 'input window, operand 2, single buffered']
    #allocation8 [shape = 'u8[2048]{0}', space=vmem, size = 0x800, scoped, tag = 'input window, operand 4, single buffered']
    #allocation9 [shape = 's32[1]{0}', space=sflag, size = 0x4, scoped, tag = 'scoped memory for tpu_custom_call.1']
    #allocation10 [shape = 'u8[2048]{0}', space=vmem, size = 0x800, scoped, tag = 'output window, operand 0, single buffered']
    %10 = vsyncpa [#allocation3], 0
    %11 = vsyncpa [#allocation6], 0
    %12 = vsyncpa [#allocation9], 0
    %13 = vsyncpa [#allocation4], 0
    // Predicated region
    $region2: #{tpu_custom_call.1} parent=1 // pred_check
      _
    $region3: #{tpu_custom_call.1} parent=1 // pred_check_branch
      %15 = sbr.rel (0) target = $region5
    $region4: #{tpu_custom_call.1} parent=1 // pred_region
      %s17 = ssub.s32 6656, 6656
      %18 = vsyncadd [#allocation3], %s17
      %s19 = sshll.u32 [#allocation2], 4
      %s20 = int_to_ptr.vmem [resolvable:$true] %s19
      %25 = dma.hbm_to_vmem [thread:$0]  %s0, 6656, %s20, [#allocation3], 512, 512, 32
    $region5: #{tpu_custom_call.1} parent=1 // pred_fallthru
      _
    // Predicated region
    $region6: #{tpu_custom_call.1} parent=1 // pred_check
      _
    $region7: #{tpu_custom_call.1} parent=1 // pred_check_branch
      %27 = sbr.rel (0) target = $region9
    $region8: #{tpu_custom_call.1} parent=1 // pred_region
      %s29 = ssub.s32 256, 256
      %30 = vsyncadd [#allocation6], %s29
      %s32 = sshll.u32 [#allocation5], 4
      %s33 = int_to_ptr.vmem [resolvable:$true] %s32
      %35 = dma.hbm_to_vmem [thread:$0]  %s1, 256, %s33, [#allocation6]
    $region9: #{tpu_custom_call.1} parent=1 // pred_fallthru
      _
    // Predicated region
    $region10: #{tpu_custom_call.1} parent=1 // pred_check
      _
    $region11: #{tpu_custom_call.1} parent=1 // pred_check_branch
      %37 = sbr.rel (0) target = $region13
    $region12: #{tpu_custom_call.1} parent=1 // pred_region
      %s39 = ssub.s32 64, 64
      %40 = vsyncadd [#allocation6], %s39
      %s42 = sshll.u32 [#allocation7], 4
      %s43 = int_to_ptr.vmem [resolvable:$true] %s42
      %45 = dma.hbm_to_vmem [thread:$0]  %s2, 64, %s43, [#allocation6]
    $region13: #{tpu_custom_call.1} parent=1 // pred_fallthru
      _
    // Predicated region
    $region14: #{tpu_custom_call.1} parent=1 // pred_check
      _
    $region15: #{tpu_custom_call.1} parent=1 // pred_check_branch
      %47 = sbr.rel (0) target = $region17
    $region16: #{tpu_custom_call.1} parent=1 // pred_region
      _
    $region17: #{tpu_custom_call.1} parent=1 // pred_fallthru
      _
    // Predicated region
    $region18: #{tpu_custom_call.1} parent=1 // pred_check
      _
    $region19: #{tpu_custom_call.1} parent=1 // pred_check_branch
      %49 = sbr.rel (0) target = $region21
    $region20: #{tpu_custom_call.1} parent=1 // pred_region
      %s51 = ssub.s32 64, 64
      %52 = vsyncadd [#allocation9], %s51
      %s54 = sshll.u32 [#allocation8], 4
      %s55 = int_to_ptr.vmem [resolvable:$true] %s54
      %57 = dma.hbm_to_vmem [thread:$0]  %s4, 64, %s55, [#allocation9]
    $region21: #{tpu_custom_call.1} parent=1 // pred_fallthru
      _
    // Predicated region
    $region22: #{tpu_custom_call.1} parent=1 // pred_check
      _
    $region23: #{tpu_custom_call.1} parent=1 // pred_check_branch
      %59 = sbr.rel (0) target = $region25
    $region24: #{tpu_custom_call.1} parent=1 // pred_region
      %60 = dma.done [#allocation3], 6656
    $region25: #{tpu_custom_call.1} parent=1 // pred_fallthru
      _
    // Predicated region
    $region26: #{tpu_custom_call.1} parent=1 // pred_check
      _
    $region27: #{tpu_custom_call.1} parent=1 // pred_check_branch
      %62 = sbr.rel (0) target = $region29
    $region28: #{tpu_custom_call.1} parent=1 // pred_region
      %63 = dma.done [#allocation6], 256
    $region29: #{tpu_custom_call.1} parent=1 // pred_fallthru
      _
    // Predicated region
    $region30: #{tpu_custom_call.1} parent=1 // pred_check
      _
    $region31: #{tpu_custom_call.1} parent=1 // pred_check_branch
      %65 = sbr.rel (0) target = $region33
    $region32: #{tpu_custom_call.1} parent=1 // pred_region
      %66 = dma.done [#allocation6], 64
    $region33: #{tpu_custom_call.1} parent=1 // pred_fallthru
      _
    // Predicated region
    $region34: #{tpu_custom_call.1} parent=1 // pred_check
      _
    $region35: #{tpu_custom_call.1} parent=1 // pred_check_branch
      %68 = sbr.rel (0) target = $region37
    $region36: #{tpu_custom_call.1} parent=1 // pred_region
      %69 = dma.done [#allocation9], 64
    $region37: #{tpu_custom_call.1} parent=1 // pred_fallthru
      _
    %p70 = scmp.eq.s32.totalorder 0, 0
    // Predicated region
    $region38: #{tpu_custom_call.1} parent=1 // pred_check
      %p71 = pneg %p70
    $region39: #{tpu_custom_call.1} parent=1 // pred_check_branch
      %73 = sbr.rel (%p71) target = $region41
    $region40: #{tpu_custom_call.1} parent=1 // pred_region
      %vm74 = vcmask 44032
      %75 = vst.msk [vmem:[#allocation10] sm:$0xf] %vm74, 0.0
    $region41: #{tpu_custom_call.1} parent=1 // pred_fallthru
      _
    %v76 = vld [vmem:[#allocation2] sm:$0xff]
    %v77 = vld [vmem:[#allocation2 + $0x8] sm:$0xff]
    %v78 = vld [vmem:[#allocation2 + $0x10] sm:$0xff]
    %v79 = vld [vmem:[#allocation2 + $0x18] sm:$0xff]
    %v80 = vld [vmem:[#allocation2 + $0x20] sm:$0xff]
    %v81 = vld [vmem:[#allocation2 + $0x28] sm:$0xff]
    %v82 = vld [vmem:[#allocation2 + $0x30] sm:$0xff]
    %v83 = vld [vmem:[#allocation2 + $0x38] sm:$0xff]
    %v84 = vld [vmem:[#allocation2 + $0x40] sm:$0xff]
    %v85 = vld [vmem:[#allocation2 + $0x48] sm:$0xff]
    %v86 = vld [vmem:[#allocation2 + $0x50] sm:$0xff]
    %v87 = vld [vmem:[#allocation2 + $0x58] sm:$0xff]
    %v88 = vld [vmem:[#allocation2 + $0x60] sm:$0xff]
    %v89 = vld [vmem:[#allocation2 + $0x68] sm:$0xff]
    %v90 = vld [vmem:[#allocation2 + $0x70] sm:$0xff]
    %v91 = vld [vmem:[#allocation2 + $0x78] sm:$0xff]
    %v92 = vld [vmem:[#allocation2 + $0x80] sm:$0xff]
    %v93 = vld [vmem:[#allocation2 + $0x88] sm:$0xff]
    %v94 = vld [vmem:[#allocation2 + $0x90] sm:$0xff]
    %v95 = vld [vmem:[#allocation2 + $0x98] sm:$0xff]
    %v96 = vld [vmem:[#allocation2 + $0xa0] sm:$0xff]
    %v97 = vld [vmem:[#allocation2 + $0xa8] sm:$0xff]
    %v98 = vld [vmem:[#allocation2 + $0xb0] sm:$0xff]
    %v99 = vld [vmem:[#allocation2 + $0xb8] sm:$0xff]
    %v100 = vld [vmem:[#allocation2 + $0xc0] sm:$0xff]
    %v101 = vld [vmem:[#allocation2 + $0xc8] sm:$0xff]
    %v102 = vld [vmem:[#allocation2 + $0xd0] sm:$0xff]
    %v103 = vld [vmem:[#allocation2 + $0xd8] sm:$0xff]
    %v104 = vld [vmem:[#allocation2 + $0xe0] sm:$0xff]
    %v105 = vld [vmem:[#allocation2 + $0xe8] sm:$0xff]
    %v106 = vld [vmem:[#allocation2 + $0xf0] sm:$0xff]
    %v107 = vld [vmem:[#allocation2 + $0xf8] sm:$0xff]
    %v108 = vld [vmem:[#allocation2 + $0x100] sm:$0xff]
    %v109 = vld [vmem:[#allocation2 + $0x108] sm:$0xff]
    %v110 = vld [vmem:[#allocation2 + $0x110] sm:$0xff]
    %v111 = vld [vmem:[#allocation2 + $0x118] sm:$0xff]
    %v112 = vld [vmem:[#allocation2 + $0x120] sm:$0xff]
    %v113 = vld [vmem:[#allocation2 + $0x128] sm:$0xff]
    %v114 = vld [vmem:[#allocation2 + $0x130] sm:$0xff]
    %v115 = vld [vmem:[#allocation2 + $0x138] sm:$0xff]
    %v116 = vld [vmem:[#allocation2 + $0x140] sm:$0xff]
    %v117 = vld [vmem:[#allocation2 + $0x148] sm:$0xff]
    %v118 = vld [vmem:[#allocation2 + $0x150] sm:$0xff]
    %v119 = vld [vmem:[#allocation2 + $0x158] sm:$0xff]
    %v120 = vld [vmem:[#allocation2 + $0x160] sm:$0xff]
    %v121 = vld [vmem:[#allocation2 + $0x168] sm:$0xff]
    %v122 = vld [vmem:[#allocation2 + $0x170] sm:$0xff]
    %v123 = vld [vmem:[#allocation2 + $0x178] sm:$0xff]
    %v124 = vld [vmem:[#allocation2 + $0x180] sm:$0xf]
    %v125 = vld [vmem:[#allocation2 + $0x188] sm:$0xf]
    %v126 = vld [vmem:[#allocation2 + $0x190] sm:$0xf]
    %v127 = vld [vmem:[#allocation2 + $0x198] sm:$0xf]
    %v128 = vld [vmem:[#allocation5] sm:$0xff]
    %v129 = vld [vmem:[#allocation5 + $0x8] sm:$0xff]
    %v130 = vld [vmem:[#allocation7] sm:$0xf]
    %vm131 = vcmask 818176
    %v133 = vsel %vm131, %v130, 0
    %vm135 = vcmask 1043456
    %v137 = vsel %vm135, %v124, 0
    %v140 = vsel %vm135, %v125, 0
    %v143 = vsel %vm135, %v126, 0
    %v146 = vsel %vm135, %v127, 0
    %148 = vmatprep.subr.mxu0 0.0
    %149 = vmatpush1.msra.mxu0 0.0
    %150 = vmatprep.subr.mxu0 0.0
    %151 = vmatpush1.msra.mxu0 0.0
    %152 = vmatprep.subr.mxu0 0.0
    %153 = vmatpush1.msra.mxu0 0.0
    %154 = vmatprep.subr.mxu0 %v140
    %155 = vmatpush1.msra.mxu0 %v137
    %156 = vmatprep.subr.mxu0 %v121
    %157 = vmatpush1.msra.mxu0 %v120
    %158 = vmatprep.subr.mxu0 %v117
    %159 = vmatpush1.msra.mxu0 %v116
    %160 = vmatprep.subr.mxu0 %v113
    %161 = vmatpush1.msra.mxu0 %v112
    %162 = vmatprep.subr.mxu0 %v109
    %163 = vmatpush1.msra.mxu0 %v108
    %164 = vmatprep.subr.mxu0 %v105
    %165 = vmatpush1.msra.mxu0 %v104
    %166 = vmatprep.subr.mxu0 %v101
    %167 = vmatpush1.msra.mxu0 %v100
    %168 = vmatprep.subr.mxu0 %v97
    %169 = vmatpush1.msra.mxu0 %v96
    %170 = vmatprep.subr.mxu0 %v93
    %171 = vmatpush1.msra.mxu0 %v92
    %172 = vmatprep.subr.mxu0 %v89
    %173 = vmatpush1.msra.mxu0 %v88
    %174 = vmatprep.subr.mxu0 %v85
    %175 = vmatpush1.msra.mxu0 %v84
    %176 = vmatprep.subr.mxu0 %v81
    %177 = vmatpush1.msra.mxu0 %v80
    %178 = vmatprep.subr.mxu0 %v77
    %179 = vmatpush1.msra.mxu0 %v76
    %180 = vmatprep.subr.mxu0 0.0
    %181 = vmatpush2.msra.mxu0 0.0
    %182 = vmatprep.subr.mxu0 0.0
    %183 = vmatpush2.msra.mxu0 0.0
    %184 = vmatprep.subr.mxu0 0.0
    %185 = vmatpush2.msra.mxu0 0.0
    %186 = vmatprep.subr.mxu0 0.0
    %187 = vmatpush2.msra.mxu0 0.0
    %188 = vmatprep.subr.mxu0 0.0
    %189 = vmatpush2.msra.mxu0 0.0
    %190 = vmatprep.subr.mxu0 0.0
    %191 = vmatpush2.msra.mxu0 0.0
    %192 = vmatprep.subr.mxu0 0.0
    %193 = vmatpush2.msra.mxu0 0.0
    %194 = vmatprep.subr.mxu0 0.0
    %195 = vmatpush2.msra.mxu0 0.0
    %196 = vmatprep.subr.mxu0 0.0
    %197 = vmatpush2.msra.mxu0 0.0
    %198 = vmatprep.subr.mxu0 0.0
    %199 = vmatpush2.msra.mxu0 0.0
    %200 = vmatprep.subr.mxu0 0.0
    %201 = vmatpush2.msra.mxu0 0.0
    %202 = vmatprep.subr.mxu0 0.0
    %203 = vmatpush2.msra.mxu0 0.0
    %204 = vmatprep.subr.mxu0 0.0
    %205 = vmatpush2.msra.mxu0 0.0
    %206 = vmatprep.subr.mxu0 0.0
    %207 = vmatpush2.msra.mxu0 0.0
    %208 = vmatprep.subr.mxu0 0.0
    %209 = vmatpush2.msra.mxu0 0.0
    %210 = vmatprep.subr.mxu0 0.0
    %211 = vmatpush2.msra.mxu0 0.0
    %212 = vmatprep.mubr.f32.mxu0 0.0
    %213 = vmatmul.mubr.f32.gmra.mxu0 %v133
    %v214 = vpop.f32.mrf.mxu0
    %v215 = vadd.f32 0.0, %v214
    %v216 = vpop.f32.mrf.mxu0
    %v217 = vadd.f32 0.0, %v216
    %218 = vdwg.mxu0
    %219 = vmatprep.subr.mxu0 0.0
    %220 = vmatpush1.msra.mxu0 0.0
    %221 = vmatprep.subr.mxu0 0.0
    %222 = vmatpush1.msra.mxu0 0.0
    %223 = vmatprep.subr.mxu0 0.0
    %224 = vmatpush1.msra.mxu0 0.0
    %225 = vmatprep.subr.mxu0 %v146
    %226 = vmatpush1.msra.mxu0 %v143
    %227 = vmatprep.subr.mxu0 %v123
    %228 = vmatpush1.msra.mxu0 %v122
    %229 = vmatprep.subr.mxu0 %v119
    %230 = vmatpush1.msra.mxu0 %v118
    %231 = vmatprep.subr.mxu0 %v115
    %232 = vmatpush1.msra.mxu0 %v114
    %233 = vmatprep.subr.mxu0 %v111
    %234 = vmatpush1.msra.mxu0 %v110
    %235 = vmatprep.subr.mxu0 %v107
    %236 = vmatpush1.msra.mxu0 %v106
    %237 = vmatprep.subr.mxu0 %v103
    %238 = vmatpush1.msra.mxu0 %v102
    %239 = vmatprep.subr.mxu0 %v99
    %240 = vmatpush1.msra.mxu0 %v98
    %241 = vmatprep.subr.mxu0 %v95
    %242 = vmatpush1.msra.mxu0 %v94
    %243 = vmatprep.subr.mxu0 %v91
    %244 = vmatpush1.msra.mxu0 %v90
    %245 = vmatprep.subr.mxu0 %v87
    %246 = vmatpush1.msra.mxu0 %v86
    %247 = vmatprep.subr.mxu0 %v83
    %248 = vmatpush1.msra.mxu0 %v82
    %249 = vmatprep.subr.mxu0 %v79
    %250 = vmatpush1.msra.mxu0 %v78
    %251 = vmatprep.subr.mxu0 0.0
    %252 = vmatpush2.msra.mxu0 0.0
    %253 = vmatprep.subr.mxu0 0.0
    %254 = vmatpush2.msra.mxu0 0.0
    %255 = vmatprep.subr.mxu0 0.0
    %256 = vmatpush2.msra.mxu0 0.0
    %257 = vmatprep.subr.mxu0 0.0
    %258 = vmatpush2.msra.mxu0 0.0
    %259 = vmatprep.subr.mxu0 0.0
    %260 = vmatpush2.msra.mxu0 0.0
    %261 = vmatprep.subr.mxu0 0.0
    %262 = vmatpush2.msra.mxu0 0.0
    %263 = vmatprep.subr.mxu0 0.0
    %264 = vmatpush2.msra.mxu0 0.0
    %265 = vmatprep.subr.mxu0 0.0
    %266 = vmatpush2.msra.mxu0 0.0
    %267 = vmatprep.subr.mxu0 0.0
    %268 = vmatpush2.msra.mxu0 0.0
    %269 = vmatprep.subr.mxu0 0.0
    %270 = vmatpush2.msra.mxu0 0.0
    %271 = vmatprep.subr.mxu0 0.0
    %272 = vmatpush2.msra.mxu0 0.0
    %273 = vmatprep.subr.mxu0 0.0
    %274 = vmatpush2.msra.mxu0 0.0
    %275 = vmatprep.subr.mxu0 0.0
    %276 = vmatpush2.msra.mxu0 0.0
    %277 = vmatprep.subr.mxu0 0.0
    %278 = vmatpush2.msra.mxu0 0.0
    %279 = vmatprep.subr.mxu0 0.0
    %280 = vmatpush2.msra.mxu0 0.0
    %281 = vmatprep.subr.mxu0 0.0
    %282 = vmatpush2.msra.mxu0 0.0
    %283 = vmatprep.mubr.f32.mxu0 0.0
    %284 = vmatmul.mubr.f32.gmra.mxu0 %v133
    %v285 = vpop.f32.mrf.mxu0
    %v286 = vadd.f32 0.0, %v285
    %v287 = vpop.f32.mrf.mxu0
    %v288 = vadd.f32 0.0, %v287
    %289 = vdwg.mxu0
    %v290 = vld [vmem:[%s3] sm:$0xf]
    %v292 = vsel %vm131, %v290, 0
    %294 = vmatprep.subr.mxu0 0.0
    %295 = vmatpush1.msra.mxu0 0.0
    %296 = vmatprep.subr.mxu0 0.0
    %297 = vmatpush1.msra.mxu0 0.0
    %298 = vmatprep.subr.mxu0 0.0
    %299 = vmatpush1.msra.mxu0 0.0
    %300 = vmatprep.subr.mxu0 %v140
    %301 = vmatpush1.msra.mxu0 %v137
    %302 = vmatprep.subr.mxu0 %v121
    %303 = vmatpush1.msra.mxu0 %v120
    %304 = vmatprep.subr.mxu0 %v117
    %305 = vmatpush1.msra.mxu0 %v116
    %306 = vmatprep.subr.mxu0 %v113
    %307 = vmatpush1.msra.mxu0 %v112
    %308 = vmatprep.subr.mxu0 %v109
    %309 = vmatpush1.msra.mxu0 %v108
    %310 = vmatprep.subr.mxu0 %v105
    %311 = vmatpush1.msra.mxu0 %v104
    %312 = vmatprep.subr.mxu0 %v101
    %313 = vmatpush1.msra.mxu0 %v100
    %314 = vmatprep.subr.mxu0 %v97
    %315 = vmatpush1.msra.mxu0 %v96
    %316 = vmatprep.subr.mxu0 %v93
    %317 = vmatpush1.msra.mxu0 %v92
    %318 = vmatprep.subr.mxu0 %v89
    %319 = vmatpush1.msra.mxu0 %v88
    %320 = vmatprep.subr.mxu0 %v85
    %321 = vmatpush1.msra.mxu0 %v84
    %322 = vmatprep.subr.mxu0 %v81
    %323 = vmatpush1.msra.mxu0 %v80
    %324 = vmatprep.subr.mxu0 %v77
    %325 = vmatpush1.msra.mxu0 %v76
    %326 = vmatprep.subr.mxu0 0.0
    %327 = vmatpush2.msra.mxu0 0.0
    %328 = vmatprep.subr.mxu0 0.0
    %329 = vmatpush2.msra.mxu0 0.0
    %330 = vmatprep.subr.mxu0 0.0
    %331 = vmatpush2.msra.mxu0 0.0
    %332 = vmatprep.subr.mxu0 0.0
    %333 = vmatpush2.msra.mxu0 0.0
    %334 = vmatprep.subr.mxu0 0.0
    %335 = vmatpush2.msra.mxu0 0.0
    %336 = vmatprep.subr.mxu0 0.0
    %337 = vmatpush2.msra.mxu0 0.0
    %338 = vmatprep.subr.mxu0 0.0
    %339 = vmatpush2.msra.mxu0 0.0
    %340 = vmatprep.subr.mxu0 0.0
    %341 = vmatpush2.msra.mxu0 0.0
    %342 = vmatprep.subr.mxu0 0.0
    %343 = vmatpush2.msra.mxu0 0.0
    %344 = vmatprep.subr.mxu0 0.0
    %345 = vmatpush2.msra.mxu0 0.0
    %346 = vmatprep.subr.mxu0 0.0
    %347 = vmatpush2.msra.mxu0 0.0
    %348 = vmatprep.subr.mxu0 0.0
    %349 = vmatpush2.msra.mxu0 0.0
    %350 = vmatprep.subr.mxu0 0.0
    %351 = vmatpush2.msra.mxu0 0.0
    %352 = vmatprep.subr.mxu0 0.0
    %353 = vmatpush2.msra.mxu0 0.0
    %354 = vmatprep.subr.mxu0 0.0
    %355 = vmatpush2.msra.mxu0 0.0
    %356 = vmatprep.subr.mxu0 0.0
    %357 = vmatpush2.msra.mxu0 0.0
    %358 = vmatprep.mubr.f32.mxu0 0.0
    %359 = vmatmul.mubr.f32.gmra.mxu0 %v292
    %v360 = vpop.f32.mrf.mxu0
    %v361 = vadd.f32 0.0, %v360
    %v362 = vpop.f32.mrf.mxu0
    %v363 = vadd.f32 0.0, %v362
    %364 = vdwg.mxu0
    %365 = vmatprep.subr.mxu0 0.0
    %366 = vmatpush1.msra.mxu0 0.0
    %367 = vmatprep.subr.mxu0 0.0
    %368 = vmatpush1.msra.mxu0 0.0
    %369 = vmatprep.subr.mxu0 0.0
    %370 = vmatpush1.msra.mxu0 0.0
    %371 = vmatprep.subr.mxu0 %v146
    %372 = vmatpush1.msra.mxu0 %v143
    %373 = vmatprep.subr.mxu0 %v123
    %374 = vmatpush1.msra.mxu0 %v122
    %375 = vmatprep.subr.mxu0 %v119
    %376 = vmatpush1.msra.mxu0 %v118
    %377 = vmatprep.subr.mxu0 %v115
    %378 = vmatpush1.msra.mxu0 %v114
    %379 = vmatprep.subr.mxu0 %v111
    %380 = vmatpush1.msra.mxu0 %v110
    %381 = vmatprep.subr.mxu0 %v107
    %382 = vmatpush1.msra.mxu0 %v106
    %383 = vmatprep.subr.mxu0 %v103
    %384 = vmatpush1.msra.mxu0 %v102
    %385 = vmatprep.subr.mxu0 %v99
    %386 = vmatpush1.msra.mxu0 %v98
    %387 = vmatprep.subr.mxu0 %v95
    %388 = vmatpush1.msra.mxu0 %v94
    %389 = vmatprep.subr.mxu0 %v91
    %390 = vmatpush1.msra.mxu0 %v90
    %391 = vmatprep.subr.mxu0 %v87
    %392 = vmatpush1.msra.mxu0 %v86
    %393 = vmatprep.subr.mxu0 %v83
    %394 = vmatpush1.msra.mxu0 %v82
    %395 = vmatprep.subr.mxu0 %v79
    %396 = vmatpush1.msra.mxu0 %v78
    %397 = vmatprep.subr.mxu0 0.0
    %398 = vmatpush2.msra.mxu0 0.0
    %399 = vmatprep.subr.mxu0 0.0
    %400 = vmatpush2.msra.mxu0 0.0
    %401 = vmatprep.subr.mxu0 0.0
    %402 = vmatpush2.msra.mxu0 0.0
    %403 = vmatprep.subr.mxu0 0.0
    %404 = vmatpush2.msra.mxu0 0.0
    %405 = vmatprep.subr.mxu0 0.0
    %406 = vmatpush2.msra.mxu0 0.0
    %407 = vmatprep.subr.mxu0 0.0
    %408 = vmatpush2.msra.mxu0 0.0
    %409 = vmatprep.subr.mxu0 0.0
    %410 = vmatpush2.msra.mxu0 0.0
    %411 = vmatprep.subr.mxu0 0.0
    %412 = vmatpush2.msra.mxu0 0.0
    %413 = vmatprep.subr.mxu0 0.0
    %414 = vmatpush2.msra.mxu0 0.0
    %415 = vmatprep.subr.mxu0 0.0
    %416 = vmatpush2.msra.mxu0 0.0
    %417 = vmatprep.subr.mxu0 0.0
    %418 = vmatpush2.msra.mxu0 0.0
    %419 = vmatprep.subr.mxu0 0.0
    %420 = vmatpush2.msra.mxu0 0.0
    %421 = vmatprep.subr.mxu0 0.0
    %422 = vmatpush2.msra.mxu0 0.0
    %423 = vmatprep.subr.mxu0 0.0
    %424 = vmatpush2.msra.mxu0 0.0
    %425 = vmatprep.subr.mxu0 0.0
    %426 = vmatpush2.msra.mxu0 0.0
    %427 = vmatprep.subr.mxu0 0.0
    %428 = vmatpush2.msra.mxu0 0.0
    %429 = vmatprep.mubr.f32.mxu0 0.0
    %430 = vmatmul.mubr.f32.gmra.mxu0 %v292
    %v431 = vpop.f32.mrf.mxu0
    %v432 = vadd.f32 0.0, %v431
    %v433 = vpop.f32.mrf.mxu0
    %v434 = vadd.f32 0.0, %v433
    %435 = vdwg.mxu0
    %v436 = vld [vmem:[#allocation8] sm:$0xf]
    %v439 = vcombine.high %v128, %v128
    %v440 = vcombine.high %v129, %v129
    %vm441 = vcmask 31744
    %v443 = vsel %vm441, %v436, 0
    %v445 = vsel %vm135, %v128, 0
    %v447 = vsel %vm135, %v439, 0
    %v449 = vsel %vm135, %v129, 0
    %v451 = vsel %vm135, %v440, 0
    %453 = vmatprep.subr.mxu0 0.0
    %454 = vmatpush1.msra.mxu0 0.0
    %455 = vmatprep.subr.mxu0 0.0
    %456 = vmatpush1.msra.mxu0 0.0
    %457 = vmatprep.subr.mxu0 0.0
    %458 = vmatpush1.msra.mxu0 0.0
    %459 = vmatprep.subr.mxu0 0.0
    %460 = vmatpush1.msra.mxu0 0.0
    %461 = vmatprep.subr.mxu0 0.0
    %462 = vmatpush1.msra.mxu0 0.0
    %463 = vmatprep.subr.mxu0 0.0
    %464 = vmatpush1.msra.mxu0 0.0
    %465 = vmatprep.subr.mxu0 0.0
    %466 = vmatpush1.msra.mxu0 0.0
    %467 = vmatprep.subr.mxu0 0.0
    %468 = vmatpush1.msra.mxu0 0.0
    %469 = vmatprep.subr.mxu0 0.0
    %470 = vmatpush1.msra.mxu0 0.0
    %471 = vmatprep.subr.mxu0 0.0
    %472 = vmatpush1.msra.mxu0 0.0
    %473 = vmatprep.subr.mxu0 0.0
    %474 = vmatpush1.msra.mxu0 0.0
    %475 = vmatprep.subr.mxu0 0.0
    %476 = vmatpush1.msra.mxu0 0.0
    %477 = vmatprep.subr.mxu0 0.0
    %478 = vmatpush1.msra.mxu0 0.0
    %479 = vmatprep.subr.mxu0 0.0
    %480 = vmatpush1.msra.mxu0 0.0
    %481 = vmatprep.subr.mxu0 0.0
    %482 = vmatpush1.msra.mxu0 0.0
    %483 = vmatprep.subr.mxu0 %v447
    %484 = vmatpush1.msra.mxu0 %v445
    %485 = vmatprep.subr.mxu0 0.0
    %486 = vmatpush2.msra.mxu0 0.0
    %487 = vmatprep.subr.mxu0 0.0
    %488 = vmatpush2.msra.mxu0 0.0
    %489 = vmatprep.subr.mxu0 0.0
    %490 = vmatpush2.msra.mxu0 0.0
    %491 = vmatprep.subr.mxu0 0.0
    %492 = vmatpush2.msra.mxu0 0.0
    %493 = vmatprep.subr.mxu0 0.0
    %494 = vmatpush2.msra.mxu0 0.0
    %495 = vmatprep.subr.mxu0 0.0
    %496 = vmatpush2.msra.mxu0 0.0
    %497 = vmatprep.subr.mxu0 0.0
    %498 = vmatpush2.msra.mxu0 0.0
    %499 = vmatprep.subr.mxu0 0.0
    %500 = vmatpush2.msra.mxu0 0.0
    %501 = vmatprep.subr.mxu0 0.0
    %502 = vmatpush2.msra.mxu0 0.0
    %503 = vmatprep.subr.mxu0 0.0
    %504 = vmatpush2.msra.mxu0 0.0
    %505 = vmatprep.subr.mxu0 0.0
    %506 = vmatpush2.msra.mxu0 0.0
    %507 = vmatprep.subr.mxu0 0.0
    %508 = vmatpush2.msra.mxu0 0.0
    %509 = vmatprep.subr.mxu0 0.0
    %510 = vmatpush2.msra.mxu0 0.0
    %511 = vmatprep.subr.mxu0 0.0
    %512 = vmatpush2.msra.mxu0 0.0
    %513 = vmatprep.subr.mxu0 0.0
    %514 = vmatpush2.msra.mxu0 0.0
    %515 = vmatprep.subr.mxu0 0.0
    %516 = vmatpush2.msra.mxu0 0.0
    %517 = vmatprep.mubr.f32.mxu0 0.0
    %518 = vmatmul.mubr.f32.gmra.mxu0 %v443
    %v519 = vpop.f32.mrf.mxu0
    %v520 = vadd.f32 0.0, %v519
    %v521 = vpop.f32.mrf.mxu0
    %v522 = vadd.f32 0.0, %v521
    %523 = vdwg.mxu0
    %524 = vmatprep.subr.mxu0 0.0
    %525 = vmatpush1.msra.mxu0 0.0
    %526 = vmatprep.subr.mxu0 0.0
    %527 = vmatpush1.msra.mxu0 0.0
    %528 = vmatprep.subr.mxu0 0.0
    %529 = vmatpush1.msra.mxu0 0.0
    %530 = vmatprep.subr.mxu0 0.0
    %531 = vmatpush1.msra.mxu0 0.0
    %532 = vmatprep.subr.mxu0 0.0
    %533 = vmatpush1.msra.mxu0 0.0
    %534 = vmatprep.subr.mxu0 0.0
    %535 = vmatpush1.msra.mxu0 0.0
    %536 = vmatprep.subr.mxu0 0.0
    %537 = vmatpush1.msra.mxu0 0.0
    %538 = vmatprep.subr.mxu0 0.0
    %539 = vmatpush1.msra.mxu0 0.0
    %540 = vmatprep.subr.mxu0 0.0
    %541 = vmatpush1.msra.mxu0 0.0
    %542 = vmatprep.subr.mxu0 0.0
    %543 = vmatpush1.msra.mxu0 0.0
    %544 = vmatprep.subr.mxu0 0.0
    %545 = vmatpush1.msra.mxu0 0.0
    %546 = vmatprep.subr.mxu0 0.0
    %547 = vmatpush1.msra.mxu0 0.0
    %548 = vmatprep.subr.mxu0 0.0
    %549 = vmatpush1.msra.mxu0 0.0
    %550 = vmatprep.subr.mxu0 0.0
    %551 = vmatpush1.msra.mxu0 0.0
    %552 = vmatprep.subr.mxu0 0.0
    %553 = vmatpush1.msra.mxu0 0.0
    %554 = vmatprep.subr.mxu0 %v451
    %555 = vmatpush1.msra.mxu0 %v449
    %556 = vmatprep.subr.mxu0 0.0
    %557 = vmatpush2.msra.mxu0 0.0
    %558 = vmatprep.subr.mxu0 0.0
    %559 = vmatpush2.msra.mxu0 0.0
    %560 = vmatprep.subr.mxu0 0.0
    %561 = vmatpush2.msra.mxu0 0.0
    %562 = vmatprep.subr.mxu0 0.0
    %563 = vmatpush2.msra.mxu0 0.0
    %564 = vmatprep.subr.mxu0 0.0
    %565 = vmatpush2.msra.mxu0 0.0
    %566 = vmatprep.subr.mxu0 0.0
    %567 = vmatpush2.msra.mxu0 0.0
    %568 = vmatprep.subr.mxu0 0.0
    %569 = vmatpush2.msra.mxu0 0.0
    %570 = vmatprep.subr.mxu0 0.0
    %571 = vmatpush2.msra.mxu0 0.0
    %572 = vmatprep.subr.mxu0 0.0
    %573 = vmatpush2.msra.mxu0 0.0
    %574 = vmatprep.subr.mxu0 0.0
    %575 = vmatpush2.msra.mxu0 0.0
    %576 = vmatprep.subr.mxu0 0.0
    %577 = vmatpush2.msra.mxu0 0.0
    %578 = vmatprep.subr.mxu0 0.0
    %579 = vmatpush2.msra.mxu0 0.0
    %580 = vmatprep.subr.mxu0 0.0
    %581 = vmatpush2.msra.mxu0 0.0
    %582 = vmatprep.subr.mxu0 0.0
    %583 = vmatpush2.msra.mxu0 0.0
    %584 = vmatprep.subr.mxu0 0.0
    %585 = vmatpush2.msra.mxu0 0.0
    %586 = vmatprep.subr.mxu0 0.0
    %587 = vmatpush2.msra.mxu0 0.0
    %588 = vmatprep.mubr.f32.mxu0 0.0
    %589 = vmatmul.mubr.f32.gmra.mxu0 %v443
    %v590 = vpop.f32.mrf.mxu0
    %v591 = vadd.f32 0.0, %v590
    %v592 = vpop.f32.mrf.mxu0
    %v593 = vadd.f32 0.0, %v592
    %594 = vdwg.mxu0
    %595 = vmatprep.subr.mxu0 0.0
    %596 = vmatpush1.msra.mxu0 1.0
    %597 = vmatprep.subr.mxu0 0.0
    %598 = vmatpush1.msra.mxu0 1.0
    %599 = vmatprep.subr.mxu0 0.0
    %600 = vmatpush1.msra.mxu0 1.0
    %601 = vmatprep.subr.mxu0 0.0
    %602 = vmatpush1.msra.mxu0 1.0
    %603 = vmatprep.subr.mxu0 0.0
    %604 = vmatpush1.msra.mxu0 1.0
    %605 = vmatprep.subr.mxu0 0.0
    %606 = vmatpush1.msra.mxu0 1.0
    %607 = vmatprep.subr.mxu0 0.0
    %608 = vmatpush1.msra.mxu0 1.0
    %609 = vmatprep.subr.mxu0 0.0
    %610 = vmatpush1.msra.mxu0 1.0
    %611 = vmatprep.subr.mxu0 0.0
    %612 = vmatpush1.msra.mxu0 1.0
    %613 = vmatprep.subr.mxu0 0.0
    %614 = vmatpush1.msra.mxu0 1.0
    %615 = vmatprep.subr.mxu0 0.0
    %616 = vmatpush1.msra.mxu0 1.0
    %617 = vmatprep.subr.mxu0 0.0
    %618 = vmatpush1.msra.mxu0 1.0
    %619 = vmatprep.subr.mxu0 0.0
    %620 = vmatpush1.msra.mxu0 1.0
    %621 = vmatprep.subr.mxu0 0.0
    %622 = vmatpush1.msra.mxu0 1.0
    %623 = vmatprep.subr.mxu0 0.0
    %624 = vmatpush1.msra.mxu0 1.0
    %625 = vmatprep.subr.mxu0 0.0
    %626 = vmatpush1.msra.mxu0 1.0
    %627 = vmatprep.subr.mxu0 0.0
    %628 = vmatpush2.msra.mxu0 1.0
    %629 = vmatprep.subr.mxu0 0.0
    %630 = vmatpush2.msra.mxu0 1.0
    %631 = vmatprep.subr.mxu0 0.0
    %632 = vmatpush2.msra.mxu0 1.0
    %633 = vmatprep.subr.mxu0 0.0
    %634 = vmatpush2.msra.mxu0 1.0
    %635 = vmatprep.subr.mxu0 0.0
    %636 = vmatpush2.msra.mxu0 1.0
    %637 = vmatprep.subr.mxu0 0.0
    %638 = vmatpush2.msra.mxu0 1.0
    %639 = vmatprep.subr.mxu0 0.0
    %640 = vmatpush2.msra.mxu0 1.0
    %641 = vmatprep.subr.mxu0 0.0
    %642 = vmatpush2.msra.mxu0 1.0
    %643 = vmatprep.subr.mxu0 0.0
    %644 = vmatpush2.msra.mxu0 1.0
    %645 = vmatprep.subr.mxu0 0.0
    %646 = vmatpush2.msra.mxu0 1.0
    %647 = vmatprep.subr.mxu0 0.0
    %648 = vmatpush2.msra.mxu0 1.0
    %649 = vmatprep.subr.mxu0 0.0
    %650 = vmatpush2.msra.mxu0 1.0
    %651 = vmatprep.subr.mxu0 0.0
    %652 = vmatpush2.msra.mxu0 1.0
    %653 = vmatprep.subr.mxu0 0.0
    %654 = vmatpush2.msra.mxu0 1.0
    %655 = vmatprep.subr.mxu0 0.0
    %656 = vmatpush2.msra.mxu0 1.0
    %657 = vmatprep.subr.mxu0 0.0
    %658 = vmatpush2.msra.mxu0 1.0
    %659 = vmatprep.mubr.f32.mxu0 %v217
    %660 = vmatmul.mubr.f32.gmra.mxu0 %v215
    %v661 = vpop.f32.mrf.mxu0
    %v662 = vadd.f32 0.0, %v661
    %v663 = vpop.f32.mrf.mxu0
    %664 = vdwg.mxu0
    %665 = vmatprep.subr.mxu0 0.0
    %666 = vmatpush1.msra.mxu0 1.0
    %667 = vmatprep.subr.mxu0 0.0
    %668 = vmatpush1.msra.mxu0 1.0
    %669 = vmatprep.subr.mxu0 0.0
    %670 = vmatpush1.msra.mxu0 1.0
    %671 = vmatprep.subr.mxu0 0.0
    %672 = vmatpush1.msra.mxu0 1.0
    %673 = vmatprep.subr.mxu0 0.0
    %674 = vmatpush1.msra.mxu0 1.0
    %675 = vmatprep.subr.mxu0 0.0
    %676 = vmatpush1.msra.mxu0 1.0
    %677 = vmatprep.subr.mxu0 0.0
    %678 = vmatpush1.msra.mxu0 1.0
    %679 = vmatprep.subr.mxu0 0.0
    %680 = vmatpush1.msra.mxu0 1.0
    %681 = vmatprep.subr.mxu0 0.0
    %682 = vmatpush1.msra.mxu0 1.0
    %683 = vmatprep.subr.mxu0 0.0
    %684 = vmatpush1.msra.mxu0 1.0
    %685 = vmatprep.subr.mxu0 0.0
    %686 = vmatpush1.msra.mxu0 1.0
    %687 = vmatprep.subr.mxu0 0.0
    %688 = vmatpush1.msra.mxu0 1.0
    %689 = vmatprep.subr.mxu0 0.0
    %690 = vmatpush1.msra.mxu0 1.0
    %691 = vmatprep.subr.mxu0 0.0
    %692 = vmatpush1.msra.mxu0 1.0
    %693 = vmatprep.subr.mxu0 0.0
    %694 = vmatpush1.msra.mxu0 1.0
    %695 = vmatprep.subr.mxu0 0.0
    %696 = vmatpush1.msra.mxu0 1.0
    %697 = vmatprep.subr.mxu0 0.0
    %698 = vmatpush2.msra.mxu0 1.0
    %699 = vmatprep.subr.mxu0 0.0
    %700 = vmatpush2.msra.mxu0 1.0
    %701 = vmatprep.subr.mxu0 0.0
    %702 = vmatpush2.msra.mxu0 1.0
    %703 = vmatprep.subr.mxu0 0.0
    %704 = vmatpush2.msra.mxu0 1.0
    %705 = vmatprep.subr.mxu0 0.0
    %706 = vmatpush2.msra.mxu0 1.0
    %707 = vmatprep.subr.mxu0 0.0
    %708 = vmatpush2.msra.mxu0 1.0
    %709 = vmatprep.subr.mxu0 0.0
    %710 = vmatpush2.msra.mxu0 1.0
    %711 = vmatprep.subr.mxu0 0.0
    %712 = vmatpush2.msra.mxu0 1.0
    %713 = vmatprep.subr.mxu0 0.0
    %714 = vmatpush2.msra.mxu0 1.0
    %715 = vmatprep.subr.mxu0 0.0
    %716 = vmatpush2.msra.mxu0 1.0
    %717 = vmatprep.subr.mxu0 0.0
    %718 = vmatpush2.msra.mxu0 1.0
    %719 = vmatprep.subr.mxu0 0.0
    %720 = vmatpush2.msra.mxu0 1.0
    %721 = vmatprep.subr.mxu0 0.0
    %722 = vmatpush2.msra.mxu0 1.0
    %723 = vmatprep.subr.mxu0 0.0
    %724 = vmatpush2.msra.mxu0 1.0
    %725 = vmatprep.subr.mxu0 0.0
    %726 = vmatpush2.msra.mxu0 1.0
    %727 = vmatprep.subr.mxu0 0.0
    %728 = vmatpush2.msra.mxu0 1.0
    %729 = vmatprep.mubr.f32.mxu0 %v288
    %730 = vmatmul.mubr.f32.gmra.mxu0 %v286
    %v731 = vpop.f32.mrf.mxu0
    %v732 = vadd.f32 %v662, %v731
    %v733 = vpop.f32.mrf.mxu0
    %734 = vdwg.mxu0
    %v735 = vmul.f32 %v215, %v215
    %v736 = vmul.f32 %v217, %v217
    %v737 = vmul.f32 %v286, %v286
    %v738 = vmul.f32 %v288, %v288
    %739 = vmatprep.subr.mxu0 0.0
    %740 = vmatpush1.msra.mxu0 1.0
    %741 = vmatprep.subr.mxu0 0.0
    %742 = vmatpush1.msra.mxu0 1.0
    %743 = vmatprep.subr.mxu0 0.0
    %744 = vmatpush1.msra.mxu0 1.0
    %745 = vmatprep.subr.mxu0 0.0
    %746 = vmatpush1.msra.mxu0 1.0
    %747 = vmatprep.subr.mxu0 0.0
    %748 = vmatpush1.msra.mxu0 1.0
    %749 = vmatprep.subr.mxu0 0.0
    %750 = vmatpush1.msra.mxu0 1.0
    %751 = vmatprep.subr.mxu0 0.0
    %752 = vmatpush1.msra.mxu0 1.0
    %753 = vmatprep.subr.mxu0 0.0
    %754 = vmatpush1.msra.mxu0 1.0
    %755 = vmatprep.subr.mxu0 0.0
    %756 = vmatpush1.msra.mxu0 1.0
    %757 = vmatprep.subr.mxu0 0.0
    %758 = vmatpush1.msra.mxu0 1.0
    %759 = vmatprep.subr.mxu0 0.0
    %760 = vmatpush1.msra.mxu0 1.0
    %761 = vmatprep.subr.mxu0 0.0
    %762 = vmatpush1.msra.mxu0 1.0
    %763 = vmatprep.subr.mxu0 0.0
    %764 = vmatpush1.msra.mxu0 1.0
    %765 = vmatprep.subr.mxu0 0.0
    %766 = vmatpush1.msra.mxu0 1.0
    %767 = vmatprep.subr.mxu0 0.0
    %768 = vmatpush1.msra.mxu0 1.0
    %769 = vmatprep.subr.mxu0 0.0
    %770 = vmatpush1.msra.mxu0 1.0
    %771 = vmatprep.subr.mxu0 0.0
    %772 = vmatpush2.msra.mxu0 1.0
    %773 = vmatprep.subr.mxu0 0.0
    %774 = vmatpush2.msra.mxu0 1.0
    %775 = vmatprep.subr.mxu0 0.0
    %776 = vmatpush2.msra.mxu0 1.0
    %777 = vmatprep.subr.mxu0 0.0
    %778 = vmatpush2.msra.mxu0 1.0
    %779 = vmatprep.subr.mxu0 0.0
    %780 = vmatpush2.msra.mxu0 1.0
    %781 = vmatprep.subr.mxu0 0.0
    %782 = vmatpush2.msra.mxu0 1.0
    %783 = vmatprep.subr.mxu0 0.0
    %784 = vmatpush2.msra.mxu0 1.0
    %785 = vmatprep.subr.mxu0 0.0
    %786 = vmatpush2.msra.mxu0 1.0
    %787 = vmatprep.subr.mxu0 0.0
    %788 = vmatpush2.msra.mxu0 1.0
    %789 = vmatprep.subr.mxu0 0.0
    %790 = vmatpush2.msra.mxu0 1.0
    %791 = vmatprep.subr.mxu0 0.0
    %792 = vmatpush2.msra.mxu0 1.0
    %793 = vmatprep.subr.mxu0 0.0
    %794 = vmatpush2.msra.mxu0 1.0
    %795 = vmatprep.subr.mxu0 0.0
    %796 = vmatpush2.msra.mxu0 1.0
    %797 = vmatprep.subr.mxu0 0.0
    %798 = vmatpush2.msra.mxu0 1.0
    %799 = vmatprep.subr.mxu0 0.0
    %800 = vmatpush2.msra.mxu0 1.0
    %801 = vmatprep.subr.mxu0 0.0
    %802 = vmatpush2.msra.mxu0 1.0
    %803 = vmatprep.mubr.f32.mxu0 %v736
    %804 = vmatmul.mubr.f32.gmra.mxu0 %v735
    %v805 = vpop.f32.mrf.mxu0
    %v806 = vadd.f32 0.0, %v805
    %v807 = vpop.f32.mrf.mxu0
    %808 = vdwg.mxu0
    %809 = vmatprep.subr.mxu0 0.0
    %810 = vmatpush1.msra.mxu0 1.0
    %811 = vmatprep.subr.mxu0 0.0
    %812 = vmatpush1.msra.mxu0 1.0
    %813 = vmatprep.subr.mxu0 0.0
    %814 = vmatpush1.msra.mxu0 1.0
    %815 = vmatprep.subr.mxu0 0.0
    %816 = vmatpush1.msra.mxu0 1.0
    %817 = vmatprep.subr.mxu0 0.0
    %818 = vmatpush1.msra.mxu0 1.0
    %819 = vmatprep.subr.mxu0 0.0
    %820 = vmatpush1.msra.mxu0 1.0
    %821 = vmatprep.subr.mxu0 0.0
    %822 = vmatpush1.msra.mxu0 1.0
    %823 = vmatprep.subr.mxu0 0.0
    %824 = vmatpush1.msra.mxu0 1.0
    %825 = vmatprep.subr.mxu0 0.0
    %826 = vmatpush1.msra.mxu0 1.0
    %827 = vmatprep.subr.mxu0 0.0
    %828 = vmatpush1.msra.mxu0 1.0
    %829 = vmatprep.subr.mxu0 0.0
    %830 = vmatpush1.msra.mxu0 1.0
    %831 = vmatprep.subr.mxu0 0.0
    %832 = vmatpush1.msra.mxu0 1.0
    %833 = vmatprep.subr.mxu0 0.0
    %834 = vmatpush1.msra.mxu0 1.0
    %835 = vmatprep.subr.mxu0 0.0
    %836 = vmatpush1.msra.mxu0 1.0
    %837 = vmatprep.subr.mxu0 0.0
    %838 = vmatpush1.msra.mxu0 1.0
    %839 = vmatprep.subr.mxu0 0.0
    %840 = vmatpush1.msra.mxu0 1.0
    %841 = vmatprep.subr.mxu0 0.0
    %842 = vmatpush2.msra.mxu0 1.0
    %843 = vmatprep.subr.mxu0 0.0
    %844 = vmatpush2.msra.mxu0 1.0
    %845 = vmatprep.subr.mxu0 0.0
    %846 = vmatpush2.msra.mxu0 1.0
    %847 = vmatprep.subr.mxu0 0.0
    %848 = vmatpush2.msra.mxu0 1.0
    %849 = vmatprep.subr.mxu0 0.0
    %850 = vmatpush2.msra.mxu0 1.0
    %851 = vmatprep.subr.mxu0 0.0
    %852 = vmatpush2.msra.mxu0 1.0
    %853 = vmatprep.subr.mxu0 0.0
    %854 = vmatpush2.msra.mxu0 1.0
    %855 = vmatprep.subr.mxu0 0.0
    %856 = vmatpush2.msra.mxu0 1.0
    %857 = vmatprep.subr.mxu0 0.0
    %858 = vmatpush2.msra.mxu0 1.0
    %859 = vmatprep.subr.mxu0 0.0
    %860 = vmatpush2.msra.mxu0 1.0
    %861 = vmatprep.subr.mxu0 0.0
    %862 = vmatpush2.msra.mxu0 1.0
    %863 = vmatprep.subr.mxu0 0.0
    %864 = vmatpush2.msra.mxu0 1.0
    %865 = vmatprep.subr.mxu0 0.0
    %866 = vmatpush2.msra.mxu0 1.0
    %867 = vmatprep.subr.mxu0 0.0
    %868 = vmatpush2.msra.mxu0 1.0
    %869 = vmatprep.subr.mxu0 0.0
    %870 = vmatpush2.msra.mxu0 1.0
    %871 = vmatprep.subr.mxu0 0.0
    %872 = vmatpush2.msra.mxu0 1.0
    %873 = vmatprep.mubr.f32.mxu0 %v738
    %874 = vmatmul.mubr.f32.gmra.mxu0 %v737
    %v875 = vpop.f32.mrf.mxu0
    %v876 = vadd.f32 %v806, %v875
    %v877 = vpop.f32.mrf.mxu0
    %878 = vdwg.mxu0
    %879 = vmatprep.subr.mxu0 0.0
    %880 = vmatpush1.msra.mxu0 1.0
    %881 = vmatprep.subr.mxu0 0.0
    %882 = vmatpush1.msra.mxu0 1.0
    %883 = vmatprep.subr.mxu0 0.0
    %884 = vmatpush1.msra.mxu0 1.0
    %885 = vmatprep.subr.mxu0 0.0
    %886 = vmatpush1.msra.mxu0 1.0
    %887 = vmatprep.subr.mxu0 0.0
    %888 = vmatpush1.msra.mxu0 1.0
    %889 = vmatprep.subr.mxu0 0.0
    %890 = vmatpush1.msra.mxu0 1.0
    %891 = vmatprep.subr.mxu0 0.0
    %892 = vmatpush1.msra.mxu0 1.0
    %893 = vmatprep.subr.mxu0 0.0
    %894 = vmatpush1.msra.mxu0 1.0
    %895 = vmatprep.subr.mxu0 0.0
    %896 = vmatpush1.msra.mxu0 1.0
    %897 = vmatprep.subr.mxu0 0.0
    %898 = vmatpush1.msra.mxu0 1.0
    %899 = vmatprep.subr.mxu0 0.0
    %900 = vmatpush1.msra.mxu0 1.0
    %901 = vmatprep.subr.mxu0 0.0
    %902 = vmatpush1.msra.mxu0 1.0
    %903 = vmatprep.subr.mxu0 0.0
    %904 = vmatpush1.msra.mxu0 1.0
    %905 = vmatprep.subr.mxu0 0.0
    %906 = vmatpush1.msra.mxu0 1.0
    %907 = vmatprep.subr.mxu0 0.0
    %908 = vmatpush1.msra.mxu0 1.0
    %909 = vmatprep.subr.mxu0 0.0
    %910 = vmatpush1.msra.mxu0 1.0
    %911 = vmatprep.subr.mxu0 0.0
    %912 = vmatpush2.msra.mxu0 1.0
    %913 = vmatprep.subr.mxu0 0.0
    %914 = vmatpush2.msra.mxu0 1.0
    %915 = vmatprep.subr.mxu0 0.0
    %916 = vmatpush2.msra.mxu0 1.0
    %917 = vmatprep.subr.mxu0 0.0
    %918 = vmatpush2.msra.mxu0 1.0
    %919 = vmatprep.subr.mxu0 0.0
    %920 = vmatpush2.msra.mxu0 1.0
    %921 = vmatprep.subr.mxu0 0.0
    %922 = vmatpush2.msra.mxu0 1.0
    %923 = vmatprep.subr.mxu0 0.0
    %924 = vmatpush2.msra.mxu0 1.0
    %925 = vmatprep.subr.mxu0 0.0
    %926 = vmatpush2.msra.mxu0 1.0
    %927 = vmatprep.subr.mxu0 0.0
    %928 = vmatpush2.msra.mxu0 1.0
    %929 = vmatprep.subr.mxu0 0.0
    %930 = vmatpush2.msra.mxu0 1.0
    %931 = vmatprep.subr.mxu0 0.0
    %932 = vmatpush2.msra.mxu0 1.0
    %933 = vmatprep.subr.mxu0 0.0
    %934 = vmatpush2.msra.mxu0 1.0
    %935 = vmatprep.subr.mxu0 0.0
    %936 = vmatpush2.msra.mxu0 1.0
    %937 = vmatprep.subr.mxu0 0.0
    %938 = vmatpush2.msra.mxu0 1.0
    %939 = vmatprep.subr.mxu0 0.0
    %940 = vmatpush2.msra.mxu0 1.0
    %941 = vmatprep.subr.mxu0 0.0
    %942 = vmatpush2.msra.mxu0 1.0
    %943 = vmatprep.mubr.f32.mxu0 %v363
    %944 = vmatmul.mubr.f32.gmra.mxu0 %v361
    %v945 = vpop.f32.mrf.mxu0
    %v946 = vadd.f32 0.0, %v945
    %v947 = vpop.f32.mrf.mxu0
    %948 = vdwg.mxu0
    %949 = vmatprep.subr.mxu0 0.0
    %950 = vmatpush1.msra.mxu0 1.0
    %951 = vmatprep.subr.mxu0 0.0
    %952 = vmatpush1.msra.mxu0 1.0
    %953 = vmatprep.subr.mxu0 0.0
    %954 = vmatpush1.msra.mxu0 1.0
    %955 = vmatprep.subr.mxu0 0.0
    %956 = vmatpush1.msra.mxu0 1.0
    %957 = vmatprep.subr.mxu0 0.0
    %958 = vmatpush1.msra.mxu0 1.0
    %959 = vmatprep.subr.mxu0 0.0
    %960 = vmatpush1.msra.mxu0 1.0
    %961 = vmatprep.subr.mxu0 0.0
    %962 = vmatpush1.msra.mxu0 1.0
    %963 = vmatprep.subr.mxu0 0.0
    %964 = vmatpush1.msra.mxu0 1.0
    %965 = vmatprep.subr.mxu0 0.0
    %966 = vmatpush1.msra.mxu0 1.0
    %967 = vmatprep.subr.mxu0 0.0
    %968 = vmatpush1.msra.mxu0 1.0
    %969 = vmatprep.subr.mxu0 0.0
    %970 = vmatpush1.msra.mxu0 1.0
    %971 = vmatprep.subr.mxu0 0.0
    %972 = vmatpush1.msra.mxu0 1.0
    %973 = vmatprep.subr.mxu0 0.0
    %974 = vmatpush1.msra.mxu0 1.0
    %975 = vmatprep.subr.mxu0 0.0
    %976 = vmatpush1.msra.mxu0 1.0
    %977 = vmatprep.subr.mxu0 0.0
    %978 = vmatpush1.msra.mxu0 1.0
    %979 = vmatprep.subr.mxu0 0.0
    %980 = vmatpush1.msra.mxu0 1.0
    %981 = vmatprep.subr.mxu0 0.0
    %982 = vmatpush2.msra.mxu0 1.0
    %983 = vmatprep.subr.mxu0 0.0
    %984 = vmatpush2.msra.mxu0 1.0
    %985 = vmatprep.subr.mxu0 0.0
    %986 = vmatpush2.msra.mxu0 1.0
    %987 = vmatprep.subr.mxu0 0.0
    %988 = vmatpush2.msra.mxu0 1.0
    %989 = vmatprep.subr.mxu0 0.0
    %990 = vmatpush2.msra.mxu0 1.0
    %991 = vmatprep.subr.mxu0 0.0
    %992 = vmatpush2.msra.mxu0 1.0
    %993 = vmatprep.subr.mxu0 0.0
    %994 = vmatpush2.msra.mxu0 1.0
    %995 = vmatprep.subr.mxu0 0.0
    %996 = vmatpush2.msra.mxu0 1.0
    %997 = vmatprep.subr.mxu0 0.0
    %998 = vmatpush2.msra.mxu0 1.0
    %999 = vmatprep.subr.mxu0 0.0
    %1000 = vmatpush2.msra.mxu0 1.0
    %1001 = vmatprep.subr.mxu0 0.0
    %1002 = vmatpush2.msra.mxu0 1.0
    %1003 = vmatprep.subr.mxu0 0.0
    %1004 = vmatpush2.msra.mxu0 1.0
    %1005 = vmatprep.subr.mxu0 0.0
    %1006 = vmatpush2.msra.mxu0 1.0
    %1007 = vmatprep.subr.mxu0 0.0
    %1008 = vmatpush2.msra.mxu0 1.0
    %1009 = vmatprep.subr.mxu0 0.0
    %1010 = vmatpush2.msra.mxu0 1.0
    %1011 = vmatprep.subr.mxu0 0.0
    %1012 = vmatpush2.msra.mxu0 1.0
    %1013 = vmatprep.mubr.f32.mxu0 %v434
    %1014 = vmatmul.mubr.f32.gmra.mxu0 %v432
    %v1015 = vpop.f32.mrf.mxu0
    %v1016 = vadd.f32 %v946, %v1015
    %v1017 = vpop.f32.mrf.mxu0
    %1018 = vdwg.mxu0
    %v1019 = vmul.f32 %v361, %v361
    %v1020 = vmul.f32 %v363, %v363
    %v1021 = vmul.f32 %v432, %v432
    %v1022 = vmul.f32 %v434, %v434
    %1023 = vmatprep.subr.mxu0 0.0
    %1024 = vmatpush1.msra.mxu0 1.0
    %1025 = vmatprep.subr.mxu0 0.0
    %1026 = vmatpush1.msra.mxu0 1.0
    %1027 = vmatprep.subr.mxu0 0.0
    %1028 = vmatpush1.msra.mxu0 1.0
    %1029 = vmatprep.subr.mxu0 0.0
    %1030 = vmatpush1.msra.mxu0 1.0
    %1031 = vmatprep.subr.mxu0 0.0
    %1032 = vmatpush1.msra.mxu0 1.0
    %1033 = vmatprep.subr.mxu0 0.0
    %1034 = vmatpush1.msra.mxu0 1.0
    %1035 = vmatprep.subr.mxu0 0.0
    %1036 = vmatpush1.msra.mxu0 1.0
    %1037 = vmatprep.subr.mxu0 0.0
    %1038 = vmatpush1.msra.mxu0 1.0
    %1039 = vmatprep.subr.mxu0 0.0
    %1040 = vmatpush1.msra.mxu0 1.0
    %1041 = vmatprep.subr.mxu0 0.0
    %1042 = vmatpush1.msra.mxu0 1.0
    %1043 = vmatprep.subr.mxu0 0.0
    %1044 = vmatpush1.msra.mxu0 1.0
    %1045 = vmatprep.subr.mxu0 0.0
    %1046 = vmatpush1.msra.mxu0 1.0
    %1047 = vmatprep.subr.mxu0 0.0
    %1048 = vmatpush1.msra.mxu0 1.0
    %1049 = vmatprep.subr.mxu0 0.0
    %1050 = vmatpush1.msra.mxu0 1.0
    %1051 = vmatprep.subr.mxu0 0.0
    %1052 = vmatpush1.msra.mxu0 1.0
    %1053 = vmatprep.subr.mxu0 0.0
    %1054 = vmatpush1.msra.mxu0 1.0
    %1055 = vmatprep.subr.mxu0 0.0
    %1056 = vmatpush2.msra.mxu0 1.0
    %1057 = vmatprep.subr.mxu0 0.0
    %1058 = vmatpush2.msra.mxu0 1.0
    %1059 = vmatprep.subr.mxu0 0.0
    %1060 = vmatpush2.msra.mxu0 1.0
    %1061 = vmatprep.subr.mxu0 0.0
    %1062 = vmatpush2.msra.mxu0 1.0
    %1063 = vmatprep.subr.mxu0 0.0
    %1064 = vmatpush2.msra.mxu0 1.0
    %1065 = vmatprep.subr.mxu0 0.0
    %1066 = vmatpush2.msra.mxu0 1.0
    %1067 = vmatprep.subr.mxu0 0.0
    %1068 = vmatpush2.msra.mxu0 1.0
    %1069 = vmatprep.subr.mxu0 0.0
    %1070 = vmatpush2.msra.mxu0 1.0
    %1071 = vmatprep.subr.mxu0 0.0
    %1072 = vmatpush2.msra.mxu0 1.0
    %1073 = vmatprep.subr.mxu0 0.0
    %1074 = vmatpush2.msra.mxu0 1.0
    %1075 = vmatprep.subr.mxu0 0.0
    %1076 = vmatpush2.msra.mxu0 1.0
    %1077 = vmatprep.subr.mxu0 0.0
    %1078 = vmatpush2.msra.mxu0 1.0
    %1079 = vmatprep.subr.mxu0 0.0
    %1080 = vmatpush2.msra.mxu0 1.0
    %1081 = vmatprep.subr.mxu0 0.0
    %1082 = vmatpush2.msra.mxu0 1.0
    %1083 = vmatprep.subr.mxu0 0.0
    %1084 = vmatpush2.msra.mxu0 1.0
    %1085 = vmatprep.subr.mxu0 0.0
    %1086 = vmatpush2.msra.mxu0 1.0
    %1087 = vmatprep.mubr.f32.mxu0 %v1020
    %1088 = vmatmul.mubr.f32.gmra.mxu0 %v1019
    %v1089 = vpop.f32.mrf.mxu0
    %v1090 = vadd.f32 0.0, %v1089
    %v1091 = vpop.f32.mrf.mxu0
    %1092 = vdwg.mxu0
    %1093 = vmatprep.subr.mxu0 0.0
    %1094 = vmatpush1.msra.mxu0 1.0
    %1095 = vmatprep.subr.mxu0 0.0
    %1096 = vmatpush1.msra.mxu0 1.0
    %1097 = vmatprep.subr.mxu0 0.0
    %1098 = vmatpush1.msra.mxu0 1.0
    %1099 = vmatprep.subr.mxu0 0.0
    %1100 = vmatpush1.msra.mxu0 1.0
    %1101 = vmatprep.subr.mxu0 0.0
    %1102 = vmatpush1.msra.mxu0 1.0
    %1103 = vmatprep.subr.mxu0 0.0
    %1104 = vmatpush1.msra.mxu0 1.0
    %1105 = vmatprep.subr.mxu0 0.0
    %1106 = vmatpush1.msra.mxu0 1.0
    %1107 = vmatprep.subr.mxu0 0.0
    %1108 = vmatpush1.msra.mxu0 1.0
    %1109 = vmatprep.subr.mxu0 0.0
    %1110 = vmatpush1.msra.mxu0 1.0
    %1111 = vmatprep.subr.mxu0 0.0
    %1112 = vmatpush1.msra.mxu0 1.0
    %1113 = vmatprep.subr.mxu0 0.0
    %1114 = vmatpush1.msra.mxu0 1.0
    %1115 = vmatprep.subr.mxu0 0.0
    %1116 = vmatpush1.msra.mxu0 1.0
    %1117 = vmatprep.subr.mxu0 0.0
    %1118 = vmatpush1.msra.mxu0 1.0
    %1119 = vmatprep.subr.mxu0 0.0
    %1120 = vmatpush1.msra.mxu0 1.0
    %1121 = vmatprep.subr.mxu0 0.0
    %1122 = vmatpush1.msra.mxu0 1.0
    %1123 = vmatprep.subr.mxu0 0.0
    %1124 = vmatpush1.msra.mxu0 1.0
    %1125 = vmatprep.subr.mxu0 0.0
    %1126 = vmatpush2.msra.mxu0 1.0
    %1127 = vmatprep.subr.mxu0 0.0
    %1128 = vmatpush2.msra.mxu0 1.0
    %1129 = vmatprep.subr.mxu0 0.0
    %1130 = vmatpush2.msra.mxu0 1.0
    %1131 = vmatprep.subr.mxu0 0.0
    %1132 = vmatpush2.msra.mxu0 1.0
    %1133 = vmatprep.subr.mxu0 0.0
    %1134 = vmatpush2.msra.mxu0 1.0
    %1135 = vmatprep.subr.mxu0 0.0
    %1136 = vmatpush2.msra.mxu0 1.0
    %1137 = vmatprep.subr.mxu0 0.0
    %1138 = vmatpush2.msra.mxu0 1.0
    %1139 = vmatprep.subr.mxu0 0.0
    %1140 = vmatpush2.msra.mxu0 1.0
    %1141 = vmatprep.subr.mxu0 0.0
    %1142 = vmatpush2.msra.mxu0 1.0
    %1143 = vmatprep.subr.mxu0 0.0
    %1144 = vmatpush2.msra.mxu0 1.0
    %1145 = vmatprep.subr.mxu0 0.0
    %1146 = vmatpush2.msra.mxu0 1.0
    %1147 = vmatprep.subr.mxu0 0.0
    %1148 = vmatpush2.msra.mxu0 1.0
    %1149 = vmatprep.subr.mxu0 0.0
    %1150 = vmatpush2.msra.mxu0 1.0
    %1151 = vmatprep.subr.mxu0 0.0
    %1152 = vmatpush2.msra.mxu0 1.0
    %1153 = vmatprep.subr.mxu0 0.0
    %1154 = vmatpush2.msra.mxu0 1.0
    %1155 = vmatprep.subr.mxu0 0.0
    %1156 = vmatpush2.msra.mxu0 1.0
    %1157 = vmatprep.mubr.f32.mxu0 %v1022
    %1158 = vmatmul.mubr.f32.gmra.mxu0 %v1021
    %v1159 = vpop.f32.mrf.mxu0
    %v1160 = vadd.f32 %v1090, %v1159
    %v1161 = vpop.f32.mrf.mxu0
    %1162 = vdwg.mxu0
    %1163 = vmatprep.subr.mxu0 0.0
    %1164 = vmatpush1.msra.mxu0 1.0
    %1165 = vmatprep.subr.mxu0 0.0
    %1166 = vmatpush1.msra.mxu0 1.0
    %1167 = vmatprep.subr.mxu0 0.0
    %1168 = vmatpush1.msra.mxu0 1.0
    %1169 = vmatprep.subr.mxu0 0.0
    %1170 = vmatpush1.msra.mxu0 1.0
    %1171 = vmatprep.subr.mxu0 0.0
    %1172 = vmatpush1.msra.mxu0 1.0
    %1173 = vmatprep.subr.mxu0 0.0
    %1174 = vmatpush1.msra.mxu0 1.0
    %1175 = vmatprep.subr.mxu0 0.0
    %1176 = vmatpush1.msra.mxu0 1.0
    %1177 = vmatprep.subr.mxu0 0.0
    %1178 = vmatpush1.msra.mxu0 1.0
    %1179 = vmatprep.subr.mxu0 0.0
    %1180 = vmatpush1.msra.mxu0 1.0
    %1181 = vmatprep.subr.mxu0 0.0
    %1182 = vmatpush1.msra.mxu0 1.0
    %1183 = vmatprep.subr.mxu0 0.0
    %1184 = vmatpush1.msra.mxu0 1.0
    %1185 = vmatprep.subr.mxu0 0.0
    %1186 = vmatpush1.msra.mxu0 1.0
    %1187 = vmatprep.subr.mxu0 0.0
    %1188 = vmatpush1.msra.mxu0 1.0
    %1189 = vmatprep.subr.mxu0 0.0
    %1190 = vmatpush1.msra.mxu0 1.0
    %1191 = vmatprep.subr.mxu0 0.0
    %1192 = vmatpush1.msra.mxu0 1.0
    %1193 = vmatprep.subr.mxu0 0.0
    %1194 = vmatpush1.msra.mxu0 1.0
    %1195 = vmatprep.subr.mxu0 0.0
    %1196 = vmatpush2.msra.mxu0 1.0
    %1197 = vmatprep.subr.mxu0 0.0
    %1198 = vmatpush2.msra.mxu0 1.0
    %1199 = vmatprep.subr.mxu0 0.0
    %1200 = vmatpush2.msra.mxu0 1.0
    %1201 = vmatprep.subr.mxu0 0.0
    %1202 = vmatpush2.msra.mxu0 1.0
    %1203 = vmatprep.subr.mxu0 0.0
    %1204 = vmatpush2.msra.mxu0 1.0
    %1205 = vmatprep.subr.mxu0 0.0
    %1206 = vmatpush2.msra.mxu0 1.0
    %1207 = vmatprep.subr.mxu0 0.0
    %1208 = vmatpush2.msra.mxu0 1.0
    %1209 = vmatprep.subr.mxu0 0.0
    %1210 = vmatpush2.msra.mxu0 1.0
    %1211 = vmatprep.subr.mxu0 0.0
    %1212 = vmatpush2.msra.mxu0 1.0
    %1213 = vmatprep.subr.mxu0 0.0
    %1214 = vmatpush2.msra.mxu0 1.0
    %1215 = vmatprep.subr.mxu0 0.0
    %1216 = vmatpush2.msra.mxu0 1.0
    %1217 = vmatprep.subr.mxu0 0.0
    %1218 = vmatpush2.msra.mxu0 1.0
    %1219 = vmatprep.subr.mxu0 0.0
    %1220 = vmatpush2.msra.mxu0 1.0
    %1221 = vmatprep.subr.mxu0 0.0
    %1222 = vmatpush2.msra.mxu0 1.0
    %1223 = vmatprep.subr.mxu0 0.0
    %1224 = vmatpush2.msra.mxu0 1.0
    %1225 = vmatprep.subr.mxu0 0.0
    %1226 = vmatpush2.msra.mxu0 1.0
    %1227 = vmatprep.mubr.f32.mxu0 %v522
    %1228 = vmatmul.mubr.f32.gmra.mxu0 %v520
    %v1229 = vpop.f32.mrf.mxu0
    %v1230 = vadd.f32 0.0, %v1229
    %v1231 = vpop.f32.mrf.mxu0
    %1232 = vdwg.mxu0
    %1233 = vmatprep.subr.mxu0 0.0
    %1234 = vmatpush1.msra.mxu0 1.0
    %1235 = vmatprep.subr.mxu0 0.0
    %1236 = vmatpush1.msra.mxu0 1.0
    %1237 = vmatprep.subr.mxu0 0.0
    %1238 = vmatpush1.msra.mxu0 1.0
    %1239 = vmatprep.subr.mxu0 0.0
    %1240 = vmatpush1.msra.mxu0 1.0
    %1241 = vmatprep.subr.mxu0 0.0
    %1242 = vmatpush1.msra.mxu0 1.0
    %1243 = vmatprep.subr.mxu0 0.0
    %1244 = vmatpush1.msra.mxu0 1.0
    %1245 = vmatprep.subr.mxu0 0.0
    %1246 = vmatpush1.msra.mxu0 1.0
    %1247 = vmatprep.subr.mxu0 0.0
    %1248 = vmatpush1.msra.mxu0 1.0
    %1249 = vmatprep.subr.mxu0 0.0
    %1250 = vmatpush1.msra.mxu0 1.0
    %1251 = vmatprep.subr.mxu0 0.0
    %1252 = vmatpush1.msra.mxu0 1.0
    %1253 = vmatprep.subr.mxu0 0.0
    %1254 = vmatpush1.msra.mxu0 1.0
    %1255 = vmatprep.subr.mxu0 0.0
    %1256 = vmatpush1.msra.mxu0 1.0
    %1257 = vmatprep.subr.mxu0 0.0
    %1258 = vmatpush1.msra.mxu0 1.0
    %1259 = vmatprep.subr.mxu0 0.0
    %1260 = vmatpush1.msra.mxu0 1.0
    %1261 = vmatprep.subr.mxu0 0.0
    %1262 = vmatpush1.msra.mxu0 1.0
    %1263 = vmatprep.subr.mxu0 0.0
    %1264 = vmatpush1.msra.mxu0 1.0
    %1265 = vmatprep.subr.mxu0 0.0
    %1266 = vmatpush2.msra.mxu0 1.0
    %1267 = vmatprep.subr.mxu0 0.0
    %1268 = vmatpush2.msra.mxu0 1.0
    %1269 = vmatprep.subr.mxu0 0.0
    %1270 = vmatpush2.msra.mxu0 1.0
    %1271 = vmatprep.subr.mxu0 0.0
    %1272 = vmatpush2.msra.mxu0 1.0
    %1273 = vmatprep.subr.mxu0 0.0
    %1274 = vmatpush2.msra.mxu0 1.0
    %1275 = vmatprep.subr.mxu0 0.0
    %1276 = vmatpush2.msra.mxu0 1.0
    %1277 = vmatprep.subr.mxu0 0.0
    %1278 = vmatpush2.msra.mxu0 1.0
    %1279 = vmatprep.subr.mxu0 0.0
    %1280 = vmatpush2.msra.mxu0 1.0
    %1281 = vmatprep.subr.mxu0 0.0
    %1282 = vmatpush2.msra.mxu0 1.0
    %1283 = vmatprep.subr.mxu0 0.0
    %1284 = vmatpush2.msra.mxu0 1.0
    %1285 = vmatprep.subr.mxu0 0.0
    %1286 = vmatpush2.msra.mxu0 1.0
    %1287 = vmatprep.subr.mxu0 0.0
    %1288 = vmatpush2.msra.mxu0 1.0
    %1289 = vmatprep.subr.mxu0 0.0
    %1290 = vmatpush2.msra.mxu0 1.0
    %1291 = vmatprep.subr.mxu0 0.0
    %1292 = vmatpush2.msra.mxu0 1.0
    %1293 = vmatprep.subr.mxu0 0.0
    %1294 = vmatpush2.msra.mxu0 1.0
    %1295 = vmatprep.subr.mxu0 0.0
    %1296 = vmatpush2.msra.mxu0 1.0
    %1297 = vmatprep.mubr.f32.mxu0 %v593
    %1298 = vmatmul.mubr.f32.gmra.mxu0 %v591
    %v1299 = vpop.f32.mrf.mxu0
    %v1300 = vadd.f32 %v1230, %v1299
    %v1301 = vpop.f32.mrf.mxu0
    %1302 = vdwg.mxu0
    %v1303 = vmul.f32 %v520, %v520
    %v1304 = vmul.f32 %v522, %v522
    %v1305 = vmul.f32 %v591, %v591
    %v1306 = vmul.f32 %v593, %v593
    %1307 = vmatprep.subr.mxu0 0.0
    %1308 = vmatpush1.msra.mxu0 1.0
    %1309 = vmatprep.subr.mxu0 0.0
    %1310 = vmatpush1.msra.mxu0 1.0
    %1311 = vmatprep.subr.mxu0 0.0
    %1312 = vmatpush1.msra.mxu0 1.0
    %1313 = vmatprep.subr.mxu0 0.0
    %1314 = vmatpush1.msra.mxu0 1.0
    %1315 = vmatprep.subr.mxu0 0.0
    %1316 = vmatpush1.msra.mxu0 1.0
    %1317 = vmatprep.subr.mxu0 0.0
    %1318 = vmatpush1.msra.mxu0 1.0
    %1319 = vmatprep.subr.mxu0 0.0
    %1320 = vmatpush1.msra.mxu0 1.0
    %1321 = vmatprep.subr.mxu0 0.0
    %1322 = vmatpush1.msra.mxu0 1.0
    %1323 = vmatprep.subr.mxu0 0.0
    %1324 = vmatpush1.msra.mxu0 1.0
    %1325 = vmatprep.subr.mxu0 0.0
    %1326 = vmatpush1.msra.mxu0 1.0
    %1327 = vmatprep.subr.mxu0 0.0
    %1328 = vmatpush1.msra.mxu0 1.0
    %1329 = vmatprep.subr.mxu0 0.0
    %1330 = vmatpush1.msra.mxu0 1.0
    %1331 = vmatprep.subr.mxu0 0.0
    %1332 = vmatpush1.msra.mxu0 1.0
    %1333 = vmatprep.subr.mxu0 0.0
    %1334 = vmatpush1.msra.mxu0 1.0
    %1335 = vmatprep.subr.mxu0 0.0
    %1336 = vmatpush1.msra.mxu0 1.0
    %1337 = vmatprep.subr.mxu0 0.0
    %1338 = vmatpush1.msra.mxu0 1.0
    %1339 = vmatprep.subr.mxu0 0.0
    %1340 = vmatpush2.msra.mxu0 1.0
    %1341 = vmatprep.subr.mxu0 0.0
    %1342 = vmatpush2.msra.mxu0 1.0
    %1343 = vmatprep.subr.mxu0 0.0
    %1344 = vmatpush2.msra.mxu0 1.0
    %1345 = vmatprep.subr.mxu0 0.0
    %1346 = vmatpush2.msra.mxu0 1.0
    %1347 = vmatprep.subr.mxu0 0.0
    %1348 = vmatpush2.msra.mxu0 1.0
    %1349 = vmatprep.subr.mxu0 0.0
    %1350 = vmatpush2.msra.mxu0 1.0
    %1351 = vmatprep.subr.mxu0 0.0
    %1352 = vmatpush2.msra.mxu0 1.0
    %1353 = vmatprep.subr.mxu0 0.0
    %1354 = vmatpush2.msra.mxu0 1.0
    %1355 = vmatprep.subr.mxu0 0.0
    %1356 = vmatpush2.msra.mxu0 1.0
    %1357 = vmatprep.subr.mxu0 0.0
    %1358 = vmatpush2.msra.mxu0 1.0
    %1359 = vmatprep.subr.mxu0 0.0
    %1360 = vmatpush2.msra.mxu0 1.0
    %1361 = vmatprep.subr.mxu0 0.0
    %1362 = vmatpush2.msra.mxu0 1.0
    %1363 = vmatprep.subr.mxu0 0.0
    %1364 = vmatpush2.msra.mxu0 1.0
    %1365 = vmatprep.subr.mxu0 0.0
    %1366 = vmatpush2.msra.mxu0 1.0
    %1367 = vmatprep.subr.mxu0 0.0
    %1368 = vmatpush2.msra.mxu0 1.0
    %1369 = vmatprep.subr.mxu0 0.0
    %1370 = vmatpush2.msra.mxu0 1.0
    %1371 = vmatprep.mubr.f32.mxu0 %v1304
    %1372 = vmatmul.mubr.f32.gmra.mxu0 %v1303
    %v1373 = vpop.f32.mrf.mxu0
    %v1374 = vadd.f32 0.0, %v1373
    %v1375 = vpop.f32.mrf.mxu0
    %1376 = vdwg.mxu0
    %1377 = vmatprep.subr.mxu0 0.0
    %1378 = vmatpush1.msra.mxu0 1.0
    %1379 = vmatprep.subr.mxu0 0.0
    %1380 = vmatpush1.msra.mxu0 1.0
    %1381 = vmatprep.subr.mxu0 0.0
    %1382 = vmatpush1.msra.mxu0 1.0
    %1383 = vmatprep.subr.mxu0 0.0
    %1384 = vmatpush1.msra.mxu0 1.0
    %1385 = vmatprep.subr.mxu0 0.0
    %1386 = vmatpush1.msra.mxu0 1.0
    %1387 = vmatprep.subr.mxu0 0.0
    %1388 = vmatpush1.msra.mxu0 1.0
    %1389 = vmatprep.subr.mxu0 0.0
    %1390 = vmatpush1.msra.mxu0 1.0
    %1391 = vmatprep.subr.mxu0 0.0
    %1392 = vmatpush1.msra.mxu0 1.0
    %1393 = vmatprep.subr.mxu0 0.0
    %1394 = vmatpush1.msra.mxu0 1.0
    %1395 = vmatprep.subr.mxu0 0.0
    %1396 = vmatpush1.msra.mxu0 1.0
    %1397 = vmatprep.subr.mxu0 0.0
    %1398 = vmatpush1.msra.mxu0 1.0
    %1399 = vmatprep.subr.mxu0 0.0
    %1400 = vmatpush1.msra.mxu0 1.0
    %1401 = vmatprep.subr.mxu0 0.0
    %1402 = vmatpush1.msra.mxu0 1.0
    %1403 = vmatprep.subr.mxu0 0.0
    %1404 = vmatpush1.msra.mxu0 1.0
    %1405 = vmatprep.subr.mxu0 0.0
    %1406 = vmatpush1.msra.mxu0 1.0
    %1407 = vmatprep.subr.mxu0 0.0
    %1408 = vmatpush1.msra.mxu0 1.0
    %1409 = vmatprep.subr.mxu0 0.0
    %1410 = vmatpush2.msra.mxu0 1.0
    %1411 = vmatprep.subr.mxu0 0.0
    %1412 = vmatpush2.msra.mxu0 1.0
    %1413 = vmatprep.subr.mxu0 0.0
    %1414 = vmatpush2.msra.mxu0 1.0
    %1415 = vmatprep.subr.mxu0 0.0
    %1416 = vmatpush2.msra.mxu0 1.0
    %1417 = vmatprep.subr.mxu0 0.0
    %1418 = vmatpush2.msra.mxu0 1.0
    %1419 = vmatprep.subr.mxu0 0.0
    %1420 = vmatpush2.msra.mxu0 1.0
    %1421 = vmatprep.subr.mxu0 0.0
    %1422 = vmatpush2.msra.mxu0 1.0
    %1423 = vmatprep.subr.mxu0 0.0
    %1424 = vmatpush2.msra.mxu0 1.0
    %1425 = vmatprep.subr.mxu0 0.0
    %1426 = vmatpush2.msra.mxu0 1.0
    %1427 = vmatprep.subr.mxu0 0.0
    %1428 = vmatpush2.msra.mxu0 1.0
    %1429 = vmatprep.subr.mxu0 0.0
    %1430 = vmatpush2.msra.mxu0 1.0
    %1431 = vmatprep.subr.mxu0 0.0
    %1432 = vmatpush2.msra.mxu0 1.0
    %1433 = vmatprep.subr.mxu0 0.0
    %1434 = vmatpush2.msra.mxu0 1.0
    %1435 = vmatprep.subr.mxu0 0.0
    %1436 = vmatpush2.msra.mxu0 1.0
    %1437 = vmatprep.subr.mxu0 0.0
    %1438 = vmatpush2.msra.mxu0 1.0
    %1439 = vmatprep.subr.mxu0 0.0
    %1440 = vmatpush2.msra.mxu0 1.0
    %1441 = vmatprep.mubr.f32.mxu0 %v1306
    %1442 = vmatmul.mubr.f32.gmra.mxu0 %v1305
    %v1443 = vpop.f32.mrf.mxu0
    %v1444 = vadd.f32 %v1374, %v1443
    %v1445 = vpop.f32.mrf.mxu0
    %1446 = vdwg.mxu0
    %v1447 = vld [vmem:[#allocation10] sm:$0xf]
    %1449 = vrot.lane.b32.xlu0 %v1016, 1
    %v1450 = vpop.permute.xlu0 %1449
    %1453 = vrot.lane.b32.xlu0 %v1300, 2
    %v1454 = vpop.permute.xlu0 %1453
    %1457 = vrot.lane.b32.xlu0 %v876, 3
    %v1458 = vpop.permute.xlu0 %1457
    %1461 = vrot.lane.b32.xlu0 %v1160, 4
    %v1462 = vpop.permute.xlu0 %1461
    %1465 = vrot.lane.b32.xlu0 %v1444, 5
    %v1466 = vpop.permute.xlu0 %1465
    %vm1468 = vcmask 7168
    %v1469 = vsel %vm1468, %v732, %v1450
    %vm1470 = vcmask 15360
    %v1471 = vsel %vm1470, %v1469, %v1454
    %vm1472 = vcmask 23552
    %v1473 = vsel %vm1472, %v1471, %v1458
    %v1474 = vsel %vm441, %v1473, %v1462
    %vm1475 = vcmask 39936
    %v1476 = vsel %vm1475, %v1474, %v1466
    %v1477 = vadd.f32 %v1447, %v1476
    %vm1478 = vcmask 44032
    %1479 = vst.msk [vmem:[#allocation10] sm:$0xf] %vm1478, %v1477
    // Predicated region
    $region42: #{tpu_custom_call.1} parent=1 // pred_check
      %p1480 = pneg %p70
    $region43: #{tpu_custom_call.1} parent=1 // pred_check_branch
      %1482 = sbr.rel (%p1480) target = $region45
    $region44: #{tpu_custom_call.1} parent=1 // pred_region
      %v1483 = vld [vmem:[#allocation10] sm:$0xf]
      %v1484 = vmul.f32 %v1483, 0.001953125
      %v1485 = vmul.f32 %v1484, %v1484
      %1487 = vrot.lane.b32.xlu0 %v1485, 3
      %v1488 = vpop.permute.xlu0 %1487
      %v1490 = vsub.f32 %v1484, %v1488
      %v1491 = vmax.f32 %v1490, 0.0
      %v1492 = vadd.f32 %v1491, 1e-05
      %v1493 = vrsqrt.pop %v1492
      %v1494 = vsel %vm1472, %v1484, %v1493
      %1495 = vst.msk [vmem:[#allocation10] sm:$0xf] %vm1478, %v1494
    $region45: #{tpu_custom_call.1} parent=1 // pred_fallthru
      _
    // Predicated region
    $region46: #{tpu_custom_call.1} parent=1 // pred_check
      _
    $region47: #{tpu_custom_call.1} parent=1 // pred_check_branch
      %1497 = sbr.rel (0) target = $region49
    $region48: #{tpu_custom_call.1} parent=1 // pred_region
      %s1499 = ssub.s32 64, 64
      %1500 = vsyncadd [#allocation4], %s1499
      %s1502 = sshll.u32 [#allocation10], 4
      %s1503 = int_to_ptr.vmem [resolvable:$true] %s1502
      %1505 = dma.vmem_to_hbm [thread:$0]  %s1503, 64, %s5, [#allocation4]
    $region49: #{tpu_custom_call.1} parent=1 // pred_fallthru
      _
    // Predicated region
    $region50: #{tpu_custom_call.1} parent=1 // pred_check
      _
    $region51: #{tpu_custom_call.1} parent=1 // pred_check_branch
      %1507 = sbr.rel (0) target = $region53
    $region52: #{tpu_custom_call.1} parent=1 // pred_region
      %1508 = dma.done [#allocation4], 64
    $region53: #{tpu_custom_call.1} parent=1 // pred_fallthru
      _
    %1509 = vsyncpa [#allocation3], 1
    %1510 = vsyncpa [#allocation6], 1
    %1511 = vsyncpa [#allocation9], 1
    %1512 = vsyncpa [#allocation4], 1

</llo_original>
